<compile_context>
chip_gen: v6e
topology: v6e:2x2x1
jax: 0.10.0
libtpu: 0.0.40
codegen_flags: <defaults>
</compile_context>

<pallas_src>
import jax
import jax.numpy as jnp
from jax.experimental import pallas as pl
from jax.experimental.pallas import tpu as pltpu


def _round_up(n, m):
    return ((n + m - 1) // m) * m


def _discriminator_kernel(x_ref, w1_ref, b1_ref, w2_ref, b2_ref,
                          w3_ref, b3_ref, o_ref):
    x = x_ref[...]                                              # (TB, 784) bf16

    # Layer 1: Linear(784 -> 512), bf16 MXU, f32 accumulation + LeakyReLU(0.01)
    h1 = jnp.dot(x, w1_ref[...], preferred_element_type=jnp.float32)
    h1 = h1 + b1_ref[...]                                       # (TB, 512) f32
    h1 = jnp.maximum(h1, 0.01 * h1)

    # Layer 2: Linear(512 -> 256), bf16 MXU, f32 accumulation + LeakyReLU(0.01)
    h2 = jnp.dot(h1.astype(jnp.bfloat16), w2_ref[...],
                 preferred_element_type=jnp.float32)
    h2 = h2 + b2_ref[...]                                       # (TB, 256) f32
    h2 = jnp.maximum(h2, 0.01 * h2)

    # Layer 3: Linear(256 -> 1) as VPU multiply + cross-lane reduce (XLU),
    # avoiding a degenerate N=1 MXU matmul.  Then Sigmoid (EUP exp).
    w3_row = w3_ref[...]                                        # (1, 256) f32
    h3 = jnp.sum(h2 * w3_row, axis=-1, keepdims=True) + b3_ref[...]  # (TB, 1)
    o_ref[...] = jax.nn.sigmoid(h3)


def discriminator_forward(x, params, *, block_b=256):
    """x: any shape with prod(shape) % 784 == 0 (e.g. (B,1,28,28))."""
    w1, b1, w2, b2, w3, b3 = params
    x2d = x.reshape(-1, 784)
    B = x2d.shape[0]

    # Batch tile: multiple of 16 (bf16 sublane packing), capped at block_b.
    tb = min(block_b, _round_up(B, 16))
    B_pad = _round_up(B, tb)

    x_bf16 = x2d.astype(jnp.bfloat16)
    if B_pad != B:
        x_bf16 = jnp.pad(x_bf16, ((0, B_pad - B), (0, 0)))

    # Weights: bf16 for the MXU layers; the 256->1 layer stays f32 (VPU path).
    w1b = w1.astype(jnp.bfloat16)
    w2b = w2.astype(jnp.bfloat16)
    b1f = b1.reshape(1, 512).astype(jnp.float32)
    b2f = b2.reshape(1, 256).astype(jnp.float32)
    w3_row = w3.reshape(1, 256).astype(jnp.float32)
    b3f = b3.reshape(1, 1).astype(jnp.float32)

    grid = (B_pad // tb,)

    flops = 2 * B_pad * (784 * 512 + 512 * 256 + 256)
    bytes_accessed = (B_pad * 784 * 2                      # bf16 activations in
                      + (784 * 512 + 512 * 256) * 2        # bf16 weights
                      + (512 + 256 + 256 + 1) * 4          # f32 biases + w3 row
                      + B_pad * 4)                         # f32 output
    cost = pl.CostEstimate(flops=flops, transcendentals=B_pad,
                           bytes_accessed=bytes_accessed)

    out = pl.pallas_call(
        _discriminator_kernel,
        out_shape=jax.ShapeDtypeStruct((B_pad, 1), jnp.float32),
        grid=grid,
        in_specs=[
            pl.BlockSpec((tb, 784), lambda i: (i, 0)),     # x tile (pipelined)
            pl.BlockSpec((784, 512), lambda i: (0, 0)),    # params: resident
            pl.BlockSpec((1, 512), lambda i: (0, 0)),
            pl.BlockSpec((512, 256), lambda i: (0, 0)),
            pl.BlockSpec((1, 256), lambda i: (0, 0)),
            pl.BlockSpec((1, 256), lambda i: (0, 0)),
            pl.BlockSpec((1, 1), lambda i: (0, 0)),
        ],
        out_specs=pl.BlockSpec((tb, 1), lambda i: (i, 0)),
        compiler_params=pltpu.CompilerParams(
            dimension_semantics=("parallel",),
            vmem_limit_bytes=32 << 20),
        cost_estimate=cost,
    )(x_bf16, w1b, b1f, w2b, b2f, w3_row, b3f)

    return out[:B]


def init_params(key):
    """Deterministic init mimicking torch.nn.Linear (U(-1/sqrt(fan_in), +))."""
    def linear(k, fan_in, fan_out):
        kw, kb = jax.random.split(k)
        bound = 1.0 / jnp.sqrt(jnp.float32(fan_in))
        # stored as (in, out): transposed vs. torch's (out, in)
        w = jax.random.uniform(kw, (fan_in, fan_out), jnp.float32, -bound, bound)
        b = jax.random.uniform(kb, (1, fan_out), jnp.float32, -bound, bound)
        return w, b

    k1, k2, k3 = jax.random.split(key, 3)
    w1, b1 = linear(k1, 784, 512)
    w2, b2 = linear(k2, 512, 256)
    w3, b3 = linear(k3, 256, 1)
    return (w1, b1, w2, b2, w3, b3)


def _reference_forward(x, params):
    """Pure-JAX f32 reference for a sanity check."""
    w1, b1, w2, b2, w3, b3 = params
    h = x.reshape(-1, 784).astype(jnp.float32)
    h = h @ w1 + b1
    h = jnp.where(h > 0, h, 0.01 * h)
    h = h @ w2 + b2
    h = jnp.where(h > 0, h, 0.01 * h)
    h = h @ w3 + b3
    return jax.nn.sigmoid(h)


if __name__ == "__main__":
    key = jax.random.PRNGKey(0)
    k_params, k_x = jax.random.split(key)

    params = init_params(k_params)
    # MNIST-like NCHW input, flattened by the forward pass to (B, 784)
    x = jax.random.normal(k_x, (2, 1, 28, 28), jnp.float32)

    out = discriminator_forward(x, params)
    out = jax.block_until_ready(out)

    ref = _reference_forward(x, params)
    assert out.shape == (2, 1), out.shape
    # bf16 MXU operands (f32 accumulation) -> allow a modest tolerance vs f32.
    assert jnp.allclose(out, ref, atol=2e-2, rtol=2e-2), (out, ref)

    print("KERNEL_OK")
</pallas_src>

<mosaic_0001>
module attributes {stable_mosaic.version = 11 : i64} {
  func.func @_discriminator_kernel(%arg0: i32, %arg1: memref<16x784xbf16, #tpu.memory_space<vmem>>, %arg2: memref<784x512xbf16, #tpu.memory_space<vmem>>, %arg3: memref<1x512xf32, #tpu.memory_space<vmem>>, %arg4: memref<512x256xbf16, #tpu.memory_space<vmem>>, %arg5: memref<1x256xf32, #tpu.memory_space<vmem>>, %arg6: memref<1x256xf32, #tpu.memory_space<vmem>>, %arg7: memref<1x1xf32, #tpu.memory_space<vmem>>, %arg8: memref<16x1xf32, #tpu.memory_space<vmem>>) attributes {dimension_semantics = [#tpu.dimension_semantics<parallel>], iteration_bounds = array<i64: 1>, scalar_prefetch = 0 : i64, scratch_operands = 0 : i64, tpu.core_type = #tpu.core_type<tc>, window_params = [{transform_indices = @transform_0, window_bounds = array<i64: 16, 784>}, {pipeline_mode = #tpu.pipeline_mode<synchronous>, transform_indices = @transform_1, window_bounds = array<i64: 784, 512>}, {pipeline_mode = #tpu.pipeline_mode<synchronous>, transform_indices = @transform_2, window_bounds = array<i64: 1, 512>}, {pipeline_mode = #tpu.pipeline_mode<synchronous>, transform_indices = @transform_3, window_bounds = array<i64: 512, 256>}, {pipeline_mode = #tpu.pipeline_mode<synchronous>, transform_indices = @transform_4, window_bounds = array<i64: 1, 256>}, {pipeline_mode = #tpu.pipeline_mode<synchronous>, transform_indices = @transform_5, window_bounds = array<i64: 1, 256>}, {pipeline_mode = #tpu.pipeline_mode<synchronous>, transform_indices = @transform_6, window_bounds = array<i64: 1, 1>}, {transform_indices = @transform_7, window_bounds = array<i64: 16, 1>}]} {
    %c0 = arith.constant 0 : index
    %c0_0 = arith.constant 0 : index
    %0 = vector.load %arg1[%c0, %c0_0] : memref<16x784xbf16, #tpu.memory_space<vmem>>, vector<16x784xbf16>
    %c0_1 = arith.constant 0 : index
    %c0_2 = arith.constant 0 : index
    %1 = vector.load %arg2[%c0_1, %c0_2] : memref<784x512xbf16, #tpu.memory_space<vmem>>, vector<784x512xbf16>
    %cst = arith.constant dense<0.000000e+00> : vector<16x512xf32>
    %2 = tpu.matmul %0, %1, %cst {dimension_numbers = #tpu.dot_dimension_numbers<[1], [0], [0], [1], [0, 0, 1, 1], [], []>} : vector<16x784xbf16>, vector<784x512xbf16>, vector<16x512xf32> -> vector<16x512xf32>
    %c0_3 = arith.constant 0 : index
    %c0_4 = arith.constant 0 : index
    %3 = vector.load %arg3[%c0_3, %c0_4] : memref<1x512xf32, #tpu.memory_space<vmem>>, vector<1x512xf32>
    %4 = vector.broadcast %3 : vector<1x512xf32> to vector<16x512xf32>
    %5 = arith.addf %2, %4 : vector<16x512xf32>
    %cst_5 = arith.constant 0.00999999977 : f32
    %6 = vector.broadcast %cst_5 : f32 to vector<16x512xf32>
    %7 = arith.mulf %6, %5 : vector<16x512xf32>
    %8 = arith.maximumf %5, %7 : vector<16x512xf32>
    %9 = arith.truncf %8 : vector<16x512xf32> to vector<16x512xbf16>
    %c0_6 = arith.constant 0 : index
    %c0_7 = arith.constant 0 : index
    %10 = vector.load %arg4[%c0_6, %c0_7] : memref<512x256xbf16, #tpu.memory_space<vmem>>, vector<512x256xbf16>
    %cst_8 = arith.constant dense<0.000000e+00> : vector<16x256xf32>
    %11 = tpu.matmul %9, %10, %cst_8 {dimension_numbers = #tpu.dot_dimension_numbers<[1], [0], [0], [1], [0, 0, 1, 1], [], []>} : vector<16x512xbf16>, vector<512x256xbf16>, vector<16x256xf32> -> vector<16x256xf32>
    %c0_9 = arith.constant 0 : index
    %c0_10 = arith.constant 0 : index
    %12 = vector.load %arg5[%c0_9, %c0_10] : memref<1x256xf32, #tpu.memory_space<vmem>>, vector<1x256xf32>
    %13 = vector.broadcast %12 : vector<1x256xf32> to vector<16x256xf32>
    %14 = arith.addf %11, %13 : vector<16x256xf32>
    %cst_11 = arith.constant 0.00999999977 : f32
    %15 = vector.broadcast %cst_11 : f32 to vector<16x256xf32>
    %16 = arith.mulf %15, %14 : vector<16x256xf32>
    %17 = arith.maximumf %14, %16 : vector<16x256xf32>
    %c0_12 = arith.constant 0 : index
    %c0_13 = arith.constant 0 : index
    %18 = vector.load %arg6[%c0_12, %c0_13] : memref<1x256xf32, #tpu.memory_space<vmem>>, vector<1x256xf32>
    %19 = vector.broadcast %18 : vector<1x256xf32> to vector<16x256xf32>
    %20 = arith.mulf %17, %19 : vector<16x256xf32>
    %cst_14 = arith.constant dense<0.000000e+00> : vector<16xf32>
    %21 = vector.multi_reduction <add>, %20, %cst_14 [1] : vector<16x256xf32> to vector<16xf32>
    %22 = vector.shape_cast %21 : vector<16xf32> to vector<16x1xf32>
    %c0_15 = arith.constant 0 : index
    %c0_16 = arith.constant 0 : index
    %23 = vector.load %arg7[%c0_15, %c0_16] : memref<1x1xf32, #tpu.memory_space<vmem>>, vector<1x1xf32>
    %24 = vector.broadcast %23 : vector<1x1xf32> to vector<16x1xf32>
    %25 = arith.addf %22, %24 : vector<16x1xf32>
    %26 = arith.negf %25 : vector<16x1xf32>
    %27 = math.exp %26 : vector<16x1xf32>
    %cst_17 = arith.constant 1.000000e+00 : f32
    %28 = vector.broadcast %cst_17 : f32 to vector<16x1xf32>
    %29 = arith.addf %28, %27 : vector<16x1xf32>
    %30 = arith.divf %28, %29 : vector<16x1xf32>
    %c0_18 = arith.constant 0 : index
    %c0_19 = arith.constant 0 : index
    %31 = vector.load %arg8[%c0_18, %c0_19] : memref<16x1xf32, #tpu.memory_space<vmem>>, vector<16x1xf32>
    tpu.vector_store %arg8[%c0_18, %c0_19], %30 {strides = array<i32>} : memref<16x1xf32, #tpu.memory_space<vmem>>, vector<16x1xf32>,
    return
  }
  func.func @transform_0(%arg0: i32) -> (i32, i32) {
    %c0_i32 = arith.constant 0 : i32
    %c0_i32_0 = arith.constant 0 : i32
    return %arg0, %c0_i32 : i32, i32
  }
  func.func @transform_1(%arg0: i32) -> (i32, i32) {
    %c0_i32 = arith.constant 0 : i32
    %c0_i32_0 = arith.constant 0 : i32
    %c0_i32_1 = arith.constant 0 : i32
    return %c0_i32, %c0_i32_0 : i32, i32
  }
  func.func @transform_2(%arg0: i32) -> (i32, i32) {
    %c0_i32 = arith.constant 0 : i32
    %c0_i32_0 = arith.constant 0 : i32
    %c0_i32_1 = arith.constant 0 : i32
    return %c0_i32, %c0_i32_0 : i32, i32
  }
  func.func @transform_3(%arg0: i32) -> (i32, i32) {
    %c0_i32 = arith.constant 0 : i32
    %c0_i32_0 = arith.constant 0 : i32
    %c0_i32_1 = arith.constant 0 : i32
    return %c0_i32, %c0_i32_0 : i32, i32
  }
  func.func @transform_4(%arg0: i32) -> (i32, i32) {
    %c0_i32 = arith.constant 0 : i32
    %c0_i32_0 = arith.constant 0 : i32
    %c0_i32_1 = arith.constant 0 : i32
    return %c0_i32, %c0_i32_0 : i32, i32
  }
  func.func @transform_5(%arg0: i32) -> (i32, i32) {
    %c0_i32 = arith.constant 0 : i32
    %c0_i32_0 = arith.constant 0 : i32
    %c0_i32_1 = arith.constant 0 : i32
    return %c0_i32, %c0_i32_0 : i32, i32
  }
  func.func @transform_6(%arg0: i32) -> (i32, i32) {
    %c0_i32 = arith.constant 0 : i32
    %c0_i32_0 = arith.constant 0 : i32
    %c0_i32_1 = arith.constant 0 : i32
    return %c0_i32, %c0_i32_0 : i32, i32
  }
  func.func @transform_7(%arg0: i32) -> (i32, i32) {
    %c0_i32 = arith.constant 0 : i32
    %c0_i32_0 = arith.constant 0 : i32
    return %arg0, %c0_i32 : i32, i32
  }
}

</mosaic_0001>

<llo_original>
// kernel: tpu_custom_call.1
$region0: #{tpu_custom_call.1}
  #allocation0 [shape = 'u32[]', space=smem, size = 0x4, offset = 0x4, fixed_abs, tag = 'smem constant byte address 0x4 - core index']
  #allocation1 [shape = 'u32[144,128]{1,0:T(1,128)}', space=vmem, size = 0x12000, scoped, tag = 'internal scratch']
  #allocation2 [shape = 'f32[1,1]{1,0:T(1,128)S(1)}', space=vmem, size = 0x200, scoped, tag = 'scoped memory for tpu_custom_call.1']
  %s0 = inlined_call_operand.hbm [shape: bf16[16,784], index: 0, kind: input, shape index: {}]
  %s1 = inlined_call_operand.hbm [shape: bf16[784,512], index: 1, kind: input, shape index: {}]
  %s2 = inlined_call_operand.vmem [shape: f32[1,512], index: 2, kind: input, shape index: {}]
  %s3 = inlined_call_operand.hbm [shape: bf16[512,256], index: 3, kind: input, shape index: {}]
  %s4 = inlined_call_operand.vmem [shape: f32[1,256], index: 4, kind: input, shape index: {}]
  %s5 = inlined_call_operand.vmem [shape: f32[1,256], index: 5, kind: input, shape index: {}]
  %s6 = inlined_call_operand.<no memory space> [shape: f32[1,1], index: 6, kind: input, shape index: {}]
  %s7 = inlined_call_operand.vmem [shape: f32[16,1], index: 7, kind: output, shape index: {}]
  %s8 = sld [smem:[#allocation0]]
  $region50: #{tpu_custom_call.1} parent=0
    _
  %s10 = ssub.s32 1, %s8
  %s11 = scalar_select 0, %s10, %s8
  %v12 = vstv %s6
  %13 = vst [vmem:[#allocation2] sm:$0x1] %v12
  $region1: #{tpu_custom_call.1} parent=0
    #allocation3 [shape = 'u8[28672]{0}', space=vmem, size = 0x7000, scoped, tag = 'input window, operand 0, single buffered']
    #allocation4 [shape = 's32[1]{0}', space=sflag, size = 0x4, scoped, tag = 'scoped memory for tpu_custom_call.1']
    #allocation5 [shape = 'u8[802816]{0}', space=vmem, size = 0xc4000, scoped, tag = 'input window, operand 1, single buffered']
    #allocation6 [shape = 's32[1]{0}', space=sflag, size = 0x4, scoped, tag = 'scoped memory for tpu_custom_call.1']
    #allocation7 [shape = 'u8[262144]{0}', space=vmem, size = 0x40000, scoped, tag = 'input window, operand 3, single buffered']
    %14 = vsyncpa [#allocation4], 0
    %15 = vsyncpa [#allocation6], 0
    // Predicated region
    $region2: #{tpu_custom_call.1} parent=1 // pred_check
      _
    $region3: #{tpu_custom_call.1} parent=1 // pred_check_branch
      %17 = sbr.rel (0) target = $region5
    $region4: #{tpu_custom_call.1} parent=1 // pred_region
      %s19 = ssub.s32 896, 896
      %20 = vsyncadd [#allocation4], %s19
      %s21 = sshll.u32 [#allocation3], 4
      %s22 = int_to_ptr.vmem [resolvable:$true] %s21
      %27 = dma.hbm_to_vmem [thread:$0]  %s0, 896, %s22, [#allocation4], 448, 448, 28
    $region5: #{tpu_custom_call.1} parent=1 // pred_fallthru
      _
    // Predicated region
    $region6: #{tpu_custom_call.1} parent=1 // pred_check
      _
    $region7: #{tpu_custom_call.1} parent=1 // pred_check_branch
      %29 = sbr.rel (0) target = $region9
    $region8: #{tpu_custom_call.1} parent=1 // pred_region
      %s31 = ssub.s32 25088, 25088
      %32 = vsyncadd [#allocation6], %s31
      %s33 = sshll.u32 [#allocation5], 4
      %s34 = int_to_ptr.vmem [resolvable:$true] %s33
      %39 = dma.hbm_to_vmem [thread:$0]  %s1, 25088, %s34, [#allocation6], 256, 256, 16
    $region9: #{tpu_custom_call.1} parent=1 // pred_fallthru
      _
    // Predicated region
    $region10: #{tpu_custom_call.1} parent=1 // pred_check
      _
    $region11: #{tpu_custom_call.1} parent=1 // pred_check_branch
      %41 = sbr.rel (0) target = $region13
    $region12: #{tpu_custom_call.1} parent=1 // pred_region
      _
    $region13: #{tpu_custom_call.1} parent=1 // pred_fallthru
      _
    // Predicated region
    $region14: #{tpu_custom_call.1} parent=1 // pred_check
      _
    $region15: #{tpu_custom_call.1} parent=1 // pred_check_branch
      %43 = sbr.rel (0) target = $region17
    $region16: #{tpu_custom_call.1} parent=1 // pred_region
      %s45 = ssub.s32 8192, 8192
      %46 = vsyncadd [#allocation6], %s45
      %s47 = sshll.u32 [#allocation7], 4
      %s48 = int_to_ptr.vmem [resolvable:$true] %s47
      %53 = dma.hbm_to_vmem [thread:$0]  %s3, 8192, %s48, [#allocation6], 128, 128, 8
    $region17: #{tpu_custom_call.1} parent=1 // pred_fallthru
      _
    // Predicated region
    $region18: #{tpu_custom_call.1} parent=1 // pred_check
      _
    $region19: #{tpu_custom_call.1} parent=1 // pred_check_branch
      %55 = sbr.rel (0) target = $region21
    $region20: #{tpu_custom_call.1} parent=1 // pred_region
      _
    $region21: #{tpu_custom_call.1} parent=1 // pred_fallthru
      _
    // Predicated region
    $region22: #{tpu_custom_call.1} parent=1 // pred_check
      _
    $region23: #{tpu_custom_call.1} parent=1 // pred_check_branch
      %57 = sbr.rel (0) target = $region25
    $region24: #{tpu_custom_call.1} parent=1 // pred_region
      _
    $region25: #{tpu_custom_call.1} parent=1 // pred_fallthru
      _
    // Predicated region
    $region26: #{tpu_custom_call.1} parent=1 // pred_check
      _
    $region27: #{tpu_custom_call.1} parent=1 // pred_check_branch
      %59 = sbr.rel (0) target = $region29
    $region28: #{tpu_custom_call.1} parent=1 // pred_region
      _
    $region29: #{tpu_custom_call.1} parent=1 // pred_fallthru
      _
    // Predicated region
    $region30: #{tpu_custom_call.1} parent=1 // pred_check
      _
    $region31: #{tpu_custom_call.1} parent=1 // pred_check_branch
      %61 = sbr.rel (0) target = $region33
    $region32: #{tpu_custom_call.1} parent=1 // pred_region
      %62 = dma.done [#allocation4], 896
    $region33: #{tpu_custom_call.1} parent=1 // pred_fallthru
      _
    // Predicated region
    $region34: #{tpu_custom_call.1} parent=1 // pred_check
      _
    $region35: #{tpu_custom_call.1} parent=1 // pred_check_branch
      %64 = sbr.rel (0) target = $region37
    $region36: #{tpu_custom_call.1} parent=1 // pred_region
      %65 = dma.done [#allocation6], 25088
    $region37: #{tpu_custom_call.1} parent=1 // pred_fallthru
      _
    // Predicated region
    $region38: #{tpu_custom_call.1} parent=1 // pred_check
      _
    $region39: #{tpu_custom_call.1} parent=1 // pred_check_branch
      %67 = sbr.rel (0) target = $region41
    $region40: #{tpu_custom_call.1} parent=1 // pred_region
      %68 = dma.done [#allocation6], 8192
    $region41: #{tpu_custom_call.1} parent=1 // pred_fallthru
      _
    %v70 = vld [vmem:[#allocation3] sm:$0xff]
    %v71 = vld [vmem:[#allocation3 + $0x8] sm:$0xff]
    %v72 = vld [vmem:[#allocation3 + $0x10] sm:$0xff]
    %v73 = vld [vmem:[#allocation3 + $0x18] sm:$0xf]
    %v74 = vld [vmem:[#allocation3 + $0x1c] sm:$0xff]
    %v75 = vld [vmem:[#allocation3 + $0x24] sm:$0xff]
    %v76 = vld [vmem:[#allocation3 + $0x2c] sm:$0xff]
    %v77 = vld [vmem:[#allocation3 + $0x34] sm:$0xf]
    %v78 = vld [vmem:[#allocation5] sm:$0xff]
    %v79 = vld [vmem:[#allocation5 + $0x8] sm:$0xff]
    %v80 = vld [vmem:[#allocation5 + $0x10] sm:$0xff]
    %v81 = vld [vmem:[#allocation5 + $0x18] sm:$0xff]
    %v82 = vld [vmem:[#allocation5 + $0x20] sm:$0xff]
    %v83 = vld [vmem:[#allocation5 + $0x28] sm:$0xff]
    %v84 = vld [vmem:[#allocation5 + $0x30] sm:$0xff]
    %v85 = vld [vmem:[#allocation5 + $0x38] sm:$0xff]
    %v86 = vld [vmem:[#allocation5 + $0x40] sm:$0xff]
    %v87 = vld [vmem:[#allocation5 + $0x48] sm:$0xff]
    %v88 = vld [vmem:[#allocation5 + $0x50] sm:$0xff]
    %v89 = vld [vmem:[#allocation5 + $0x58] sm:$0xff]
    %v90 = vld [vmem:[#allocation5 + $0x60] sm:$0xff]
    %v91 = vld [vmem:[#allocation5 + $0x68] sm:$0xff]
    %v92 = vld [vmem:[#allocation5 + $0x70] sm:$0xff]
    %v93 = vld [vmem:[#allocation5 + $0x78] sm:$0xff]
    %v94 = vld [vmem:[#allocation5 + $0x80] sm:$0xff]
    %v95 = vld [vmem:[#allocation5 + $0x88] sm:$0xff]
    %v96 = vld [vmem:[#allocation5 + $0x90] sm:$0xff]
    %v97 = vld [vmem:[#allocation5 + $0x98] sm:$0xff]
    %v98 = vld [vmem:[#allocation5 + $0xa0] sm:$0xff]
    %v99 = vld [vmem:[#allocation5 + $0xa8] sm:$0xff]
    %v100 = vld [vmem:[#allocation5 + $0xb0] sm:$0xff]
    %v101 = vld [vmem:[#allocation5 + $0xb8] sm:$0xff]
    %v102 = vld [vmem:[#allocation5 + $0xc0] sm:$0xff]
    %v103 = vld [vmem:[#allocation5 + $0xc8] sm:$0xff]
    %v104 = vld [vmem:[#allocation5 + $0xd0] sm:$0xff]
    %v105 = vld [vmem:[#allocation5 + $0xd8] sm:$0xff]
    %v106 = vld [vmem:[#allocation5 + $0xe0] sm:$0xff]
    %v107 = vld [vmem:[#allocation5 + $0xe8] sm:$0xff]
    %v108 = vld [vmem:[#allocation5 + $0xf0] sm:$0xff]
    %v109 = vld [vmem:[#allocation5 + $0xf8] sm:$0xff]
    %v110 = vld [vmem:[#allocation5 + $0x100] sm:$0xff]
    %v111 = vld [vmem:[#allocation5 + $0x108] sm:$0xff]
    %v112 = vld [vmem:[#allocation5 + $0x110] sm:$0xff]
    %v113 = vld [vmem:[#allocation5 + $0x118] sm:$0xff]
    %v114 = vld [vmem:[#allocation5 + $0x120] sm:$0xff]
    %v115 = vld [vmem:[#allocation5 + $0x128] sm:$0xff]
    %v116 = vld [vmem:[#allocation5 + $0x130] sm:$0xff]
    %v117 = vld [vmem:[#allocation5 + $0x138] sm:$0xff]
    %v118 = vld [vmem:[#allocation5 + $0x140] sm:$0xff]
    %v119 = vld [vmem:[#allocation5 + $0x148] sm:$0xff]
    %v120 = vld [vmem:[#allocation5 + $0x150] sm:$0xff]
    %v121 = vld [vmem:[#allocation5 + $0x158] sm:$0xff]
    %v122 = vld [vmem:[#allocation5 + $0x160] sm:$0xff]
    %v123 = vld [vmem:[#allocation5 + $0x168] sm:$0xff]
    %v124 = vld [vmem:[#allocation5 + $0x170] sm:$0xff]
    %v125 = vld [vmem:[#allocation5 + $0x178] sm:$0xff]
    %v126 = vld [vmem:[#allocation5 + $0x180] sm:$0xff]
    %v127 = vld [vmem:[#allocation5 + $0x188] sm:$0xff]
    %v128 = vld [vmem:[#allocation5 + $0x190] sm:$0xff]
    %v129 = vld [vmem:[#allocation5 + $0x198] sm:$0xff]
    %v130 = vld [vmem:[#allocation5 + $0x1a0] sm:$0xff]
    %v131 = vld [vmem:[#allocation5 + $0x1a8] sm:$0xff]
    %v132 = vld [vmem:[#allocation5 + $0x1b0] sm:$0xff]
    %v133 = vld [vmem:[#allocation5 + $0x1b8] sm:$0xff]
    %v134 = vld [vmem:[#allocation5 + $0x1c0] sm:$0xff]
    %v135 = vld [vmem:[#allocation5 + $0x1c8] sm:$0xff]
    %v136 = vld [vmem:[#allocation5 + $0x1d0] sm:$0xff]
    %v137 = vld [vmem:[#allocation5 + $0x1d8] sm:$0xff]
    %v138 = vld [vmem:[#allocation5 + $0x1e0] sm:$0xff]
    %v139 = vld [vmem:[#allocation5 + $0x1e8] sm:$0xff]
    %v140 = vld [vmem:[#allocation5 + $0x1f0] sm:$0xff]
    %v141 = vld [vmem:[#allocation5 + $0x1f8] sm:$0xff]
    %v142 = vld [vmem:[#allocation5 + $0x200] sm:$0xff]
    %v143 = vld [vmem:[#allocation5 + $0x208] sm:$0xff]
    %v144 = vld [vmem:[#allocation5 + $0x210] sm:$0xff]
    %v145 = vld [vmem:[#allocation5 + $0x218] sm:$0xff]
    %v146 = vld [vmem:[#allocation5 + $0x220] sm:$0xff]
    %v147 = vld [vmem:[#allocation5 + $0x228] sm:$0xff]
    %v148 = vld [vmem:[#allocation5 + $0x230] sm:$0xff]
    %v149 = vld [vmem:[#allocation5 + $0x238] sm:$0xff]
    %v150 = vld [vmem:[#allocation5 + $0x240] sm:$0xff]
    %v151 = vld [vmem:[#allocation5 + $0x248] sm:$0xff]
    %v152 = vld [vmem:[#allocation5 + $0x250] sm:$0xff]
    %v153 = vld [vmem:[#allocation5 + $0x258] sm:$0xff]
    %v154 = vld [vmem:[#allocation5 + $0x260] sm:$0xff]
    %v155 = vld [vmem:[#allocation5 + $0x268] sm:$0xff]
    %v156 = vld [vmem:[#allocation5 + $0x270] sm:$0xff]
    %v157 = vld [vmem:[#allocation5 + $0x278] sm:$0xff]
    %v158 = vld [vmem:[#allocation5 + $0x280] sm:$0xff]
    %v159 = vld [vmem:[#allocation5 + $0x288] sm:$0xff]
    %v160 = vld [vmem:[#allocation5 + $0x290] sm:$0xff]
    %v161 = vld [vmem:[#allocation5 + $0x298] sm:$0xff]
    %v162 = vld [vmem:[#allocation5 + $0x2a0] sm:$0xff]
    %v163 = vld [vmem:[#allocation5 + $0x2a8] sm:$0xff]
    %v164 = vld [vmem:[#allocation5 + $0x2b0] sm:$0xff]
    %v165 = vld [vmem:[#allocation5 + $0x2b8] sm:$0xff]
    %v166 = vld [vmem:[#allocation5 + $0x2c0] sm:$0xff]
    %v167 = vld [vmem:[#allocation5 + $0x2c8] sm:$0xff]
    %v168 = vld [vmem:[#allocation5 + $0x2d0] sm:$0xff]
    %v169 = vld [vmem:[#allocation5 + $0x2d8] sm:$0xff]
    %v170 = vld [vmem:[#allocation5 + $0x2e0] sm:$0xff]
    %v171 = vld [vmem:[#allocation5 + $0x2e8] sm:$0xff]
    %v172 = vld [vmem:[#allocation5 + $0x2f0] sm:$0xff]
    %v173 = vld [vmem:[#allocation5 + $0x2f8] sm:$0xff]
    %v174 = vld [vmem:[#allocation5 + $0x300] sm:$0xff]
    %v175 = vld [vmem:[#allocation5 + $0x308] sm:$0xff]
    %v176 = vld [vmem:[#allocation5 + $0x310] sm:$0xff]
    %v177 = vld [vmem:[#allocation5 + $0x318] sm:$0xff]
    %v178 = vld [vmem:[#allocation5 + $0x320] sm:$0xff]
    %v179 = vld [vmem:[#allocation5 + $0x328] sm:$0xff]
    %v180 = vld [vmem:[#allocation5 + $0x330] sm:$0xff]
    %v181 = vld [vmem:[#allocation5 + $0x338] sm:$0xff]
    %v182 = vld [vmem:[#allocation5 + $0x340] sm:$0xff]
    %v183 = vld [vmem:[#allocation5 + $0x348] sm:$0xff]
    %v184 = vld [vmem:[#allocation5 + $0x350] sm:$0xff]
    %v185 = vld [vmem:[#allocation5 + $0x358] sm:$0xff]
    %v186 = vld [vmem:[#allocation5 + $0x360] sm:$0xff]
    %v187 = vld [vmem:[#allocation5 + $0x368] sm:$0xff]
    %v188 = vld [vmem:[#allocation5 + $0x370] sm:$0xff]
    %v189 = vld [vmem:[#allocation5 + $0x378] sm:$0xff]
    %v190 = vld [vmem:[#allocation5 + $0x380] sm:$0xff]
    %v191 = vld [vmem:[#allocation5 + $0x388] sm:$0xff]
    %v192 = vld [vmem:[#allocation5 + $0x390] sm:$0xff]
    %v193 = vld [vmem:[#allocation5 + $0x398] sm:$0xff]
    %v194 = vld [vmem:[#allocation5 + $0x3a0] sm:$0xff]
    %v195 = vld [vmem:[#allocation5 + $0x3a8] sm:$0xff]
    %v196 = vld [vmem:[#allocation5 + $0x3b0] sm:$0xff]
    %v197 = vld [vmem:[#allocation5 + $0x3b8] sm:$0xff]
    %v198 = vld [vmem:[#allocation5 + $0x3c0] sm:$0xff]
    %v199 = vld [vmem:[#allocation5 + $0x3c8] sm:$0xff]
    %v200 = vld [vmem:[#allocation5 + $0x3d0] sm:$0xff]
    %v201 = vld [vmem:[#allocation5 + $0x3d8] sm:$0xff]
    %v202 = vld [vmem:[#allocation5 + $0x3e0] sm:$0xff]
    %v203 = vld [vmem:[#allocation5 + $0x3e8] sm:$0xff]
    %v204 = vld [vmem:[#allocation5 + $0x3f0] sm:$0xff]
    %v205 = vld [vmem:[#allocation5 + $0x3f8] sm:$0xff]
    %v206 = vld [vmem:[#allocation5 + $0x400] sm:$0xff]
    %v207 = vld [vmem:[#allocation5 + $0x408] sm:$0xff]
    %v208 = vld [vmem:[#allocation5 + $0x410] sm:$0xff]
    %v209 = vld [vmem:[#allocation5 + $0x418] sm:$0xff]
    %v210 = vld [vmem:[#allocation5 + $0x420] sm:$0xff]
    %v211 = vld [vmem:[#allocation5 + $0x428] sm:$0xff]
    %v212 = vld [vmem:[#allocation5 + $0x430] sm:$0xff]
    %v213 = vld [vmem:[#allocation5 + $0x438] sm:$0xff]
    %v214 = vld [vmem:[#allocation5 + $0x440] sm:$0xff]
    %v215 = vld [vmem:[#allocation5 + $0x448] sm:$0xff]
    %v216 = vld [vmem:[#allocation5 + $0x450] sm:$0xff]
    %v217 = vld [vmem:[#allocation5 + $0x458] sm:$0xff]
    %v218 = vld [vmem:[#allocation5 + $0x460] sm:$0xff]
    %v219 = vld [vmem:[#allocation5 + $0x468] sm:$0xff]
    %v220 = vld [vmem:[#allocation5 + $0x470] sm:$0xff]
    %v221 = vld [vmem:[#allocation5 + $0x478] sm:$0xff]
    %v222 = vld [vmem:[#allocation5 + $0x480] sm:$0xff]
    %v223 = vld [vmem:[#allocation5 + $0x488] sm:$0xff]
    %v224 = vld [vmem:[#allocation5 + $0x490] sm:$0xff]
    %v225 = vld [vmem:[#allocation5 + $0x498] sm:$0xff]
    %v226 = vld [vmem:[#allocation5 + $0x4a0] sm:$0xff]
    %v227 = vld [vmem:[#allocation5 + $0x4a8] sm:$0xff]
    %v228 = vld [vmem:[#allocation5 + $0x4b0] sm:$0xff]
    %v229 = vld [vmem:[#allocation5 + $0x4b8] sm:$0xff]
    %v230 = vld [vmem:[#allocation5 + $0x4c0] sm:$0xff]
    %v231 = vld [vmem:[#allocation5 + $0x4c8] sm:$0xff]
    %v232 = vld [vmem:[#allocation5 + $0x4d0] sm:$0xff]
    %v233 = vld [vmem:[#allocation5 + $0x4d8] sm:$0xff]
    %v234 = vld [vmem:[#allocation5 + $0x4e0] sm:$0xff]
    %v235 = vld [vmem:[#allocation5 + $0x4e8] sm:$0xff]
    %v236 = vld [vmem:[#allocation5 + $0x4f0] sm:$0xff]
    %v237 = vld [vmem:[#allocation5 + $0x4f8] sm:$0xff]
    %v238 = vld [vmem:[#allocation5 + $0x500] sm:$0xff]
    %v239 = vld [vmem:[#allocation5 + $0x508] sm:$0xff]
    %v240 = vld [vmem:[#allocation5 + $0x510] sm:$0xff]
    %v241 = vld [vmem:[#allocation5 + $0x518] sm:$0xff]
    %v242 = vld [vmem:[#allocation5 + $0x520] sm:$0xff]
    %v243 = vld [vmem:[#allocation5 + $0x528] sm:$0xff]
    %v244 = vld [vmem:[#allocation5 + $0x530] sm:$0xff]
    %v245 = vld [vmem:[#allocation5 + $0x538] sm:$0xff]
    %v246 = vld [vmem:[#allocation5 + $0x540] sm:$0xff]
    %v247 = vld [vmem:[#allocation5 + $0x548] sm:$0xff]
    %v248 = vld [vmem:[#allocation5 + $0x550] sm:$0xff]
    %v249 = vld [vmem:[#allocation5 + $0x558] sm:$0xff]
    %v250 = vld [vmem:[#allocation5 + $0x560] sm:$0xff]
    %v251 = vld [vmem:[#allocation5 + $0x568] sm:$0xff]
    %v252 = vld [vmem:[#allocation5 + $0x570] sm:$0xff]
    %v253 = vld [vmem:[#allocation5 + $0x578] sm:$0xff]
    %v254 = vld [vmem:[#allocation5 + $0x580] sm:$0xff]
    %v255 = vld [vmem:[#allocation5 + $0x588] sm:$0xff]
    %v256 = vld [vmem:[#allocation5 + $0x590] sm:$0xff]
    %v257 = vld [vmem:[#allocation5 + $0x598] sm:$0xff]
    %v258 = vld [vmem:[#allocation5 + $0x5a0] sm:$0xff]
    %v259 = vld [vmem:[#allocation5 + $0x5a8] sm:$0xff]
    %v260 = vld [vmem:[#allocation5 + $0x5b0] sm:$0xff]
    %v261 = vld [vmem:[#allocation5 + $0x5b8] sm:$0xff]
    %v262 = vld [vmem:[#allocation5 + $0x5c0] sm:$0xff]
    %v263 = vld [vmem:[#allocation5 + $0x5c8] sm:$0xff]
    %v264 = vld [vmem:[#allocation5 + $0x5d0] sm:$0xff]
    %v265 = vld [vmem:[#allocation5 + $0x5d8] sm:$0xff]
    %v266 = vld [vmem:[#allocation5 + $0x5e0] sm:$0xff]
    %v267 = vld [vmem:[#allocation5 + $0x5e8] sm:$0xff]
    %v268 = vld [vmem:[#allocation5 + $0x5f0] sm:$0xff]
    %v269 = vld [vmem:[#allocation5 + $0x5f8] sm:$0xff]
    %v270 = vld [vmem:[#allocation5 + $0x600] sm:$0xff]
    %v271 = vld [vmem:[#allocation5 + $0x608] sm:$0xff]
    %v272 = vld [vmem:[#allocation5 + $0x610] sm:$0xff]
    %v273 = vld [vmem:[#allocation5 + $0x618] sm:$0xff]
    %v274 = vld [vmem:[%s2] sm:$0xf]
    %v276 = vlaneseq
    %v277 = vshrl.u32 %v276, 7
    %v278 = vsub.s32 0, %v277
    %v279 = vrot.slane %v274, %v278
    %v280 = vlaneseq
    %v281 = vshrl.u32 %v280, 7
    %v282 = vsub.s32 1, %v281
    %v283 = vrot.slane %v274, %v282
    %v284 = vlaneseq
    %v285 = vshrl.u32 %v284, 7
    %v286 = vsub.s32 2, %v285
    %v287 = vrot.slane %v274, %v286
    %v288 = vlaneseq
    %v289 = vshrl.u32 %v288, 7
    %v290 = vsub.s32 3, %v289
    %v291 = vrot.slane %v274, %v290
    %v304 = vunpack.c.l.b16 %v70
    %v305 = vunpack.c.h.b16 %v70
    %v306 = vunpack.c.l.b16 %v71
    %v307 = vunpack.c.h.b16 %v71
    %v308 = vunpack.c.l.b16 %v72
    %v309 = vunpack.c.h.b16 %v72
    %v310 = vunpack.c.l.b16 %v73
    %v311 = vunpack.c.l.b16 %v74
    %v312 = vunpack.c.h.b16 %v74
    %v313 = vunpack.c.l.b16 %v75
    %v314 = vunpack.c.h.b16 %v75
    %v315 = vunpack.c.l.b16 %v76
    %v316 = vunpack.c.h.b16 %v76
    %v317 = vunpack.c.l.b16 %v77
    %v318 = vpack.c.b16 %v311, %v304
    %v319 = vpack.c.b16 %v312, %v305
    %v320 = vpack.c.b16 %v313, %v306
    %v321 = vpack.c.b16 %v314, %v307
    %v322 = vpack.c.b16 %v315, %v308
    %v323 = vpack.c.b16 %v316, %v309
    %v324 = vpack.c.b16 %v317, %v310
    %v527 = vunpack.c.l.b16 %v78
    %v528 = vunpack.c.h.b16 %v78
    %v529 = vunpack.c.l.b16 %v79
    %v530 = vunpack.c.h.b16 %v79
    %v531 = vunpack.c.l.b16 %v80
    %v532 = vunpack.c.h.b16 %v80
    %v533 = vunpack.c.l.b16 %v81
    %v534 = vunpack.c.h.b16 %v81
    %v535 = vunpack.c.l.b16 %v82
    %v536 = vunpack.c.h.b16 %v82
    %v537 = vunpack.c.l.b16 %v83
    %v538 = vunpack.c.h.b16 %v83
    %v539 = vunpack.c.l.b16 %v84
    %v540 = vunpack.c.h.b16 %v84
    %v541 = vunpack.c.l.b16 %v85
    %v542 = vunpack.c.h.b16 %v85
    %v543 = vunpack.c.l.b16 %v86
    %v544 = vunpack.c.h.b16 %v86
    %v545 = vunpack.c.l.b16 %v87
    %v546 = vunpack.c.h.b16 %v87
    %v547 = vunpack.c.l.b16 %v88
    %v548 = vunpack.c.h.b16 %v88
    %v549 = vunpack.c.l.b16 %v89
    %v550 = vunpack.c.h.b16 %v89
    %v551 = vunpack.c.l.b16 %v90
    %v552 = vunpack.c.h.b16 %v90
    %v553 = vunpack.c.l.b16 %v91
    %v554 = vunpack.c.h.b16 %v91
    %v555 = vunpack.c.l.b16 %v92
    %v556 = vunpack.c.h.b16 %v92
    %v557 = vunpack.c.l.b16 %v93
    %v558 = vunpack.c.h.b16 %v93
    %v559 = vunpack.c.l.b16 %v94
    %v560 = vunpack.c.h.b16 %v94
    %v561 = vunpack.c.l.b16 %v95
    %v562 = vunpack.c.h.b16 %v95
    %v563 = vunpack.c.l.b16 %v96
    %v564 = vunpack.c.h.b16 %v96
    %v565 = vunpack.c.l.b16 %v97
    %v566 = vunpack.c.h.b16 %v97
    %v567 = vunpack.c.l.b16 %v98
    %v568 = vunpack.c.h.b16 %v98
    %v569 = vunpack.c.l.b16 %v99
    %v570 = vunpack.c.h.b16 %v99
    %v571 = vunpack.c.l.b16 %v100
    %v572 = vunpack.c.h.b16 %v100
    %v573 = vunpack.c.l.b16 %v101
    %v574 = vunpack.c.h.b16 %v101
    %v575 = vunpack.c.l.b16 %v102
    %v576 = vunpack.c.h.b16 %v102
    %v577 = vunpack.c.l.b16 %v103
    %v578 = vunpack.c.h.b16 %v103
    %v579 = vunpack.c.l.b16 %v104
    %v580 = vunpack.c.h.b16 %v104
    %v581 = vunpack.c.l.b16 %v105
    %v582 = vunpack.c.h.b16 %v105
    %v583 = vunpack.c.l.b16 %v106
    %v584 = vunpack.c.h.b16 %v106
    %v585 = vunpack.c.l.b16 %v107
    %v586 = vunpack.c.h.b16 %v107
    %v587 = vunpack.c.l.b16 %v108
    %v588 = vunpack.c.h.b16 %v108
    %v589 = vunpack.c.l.b16 %v109
    %v590 = vunpack.c.h.b16 %v109
    %v591 = vunpack.c.l.b16 %v110
    %v592 = vunpack.c.h.b16 %v110
    %v593 = vunpack.c.l.b16 %v111
    %v594 = vunpack.c.h.b16 %v111
    %v595 = vunpack.c.l.b16 %v112
    %v596 = vunpack.c.h.b16 %v112
    %v597 = vunpack.c.l.b16 %v113
    %v598 = vunpack.c.h.b16 %v113
    %v599 = vunpack.c.l.b16 %v114
    %v600 = vunpack.c.h.b16 %v114
    %v601 = vunpack.c.l.b16 %v115
    %v602 = vunpack.c.h.b16 %v115
    %v603 = vunpack.c.l.b16 %v116
    %v604 = vunpack.c.h.b16 %v116
    %v605 = vunpack.c.l.b16 %v117
    %v606 = vunpack.c.h.b16 %v117
    %v607 = vunpack.c.l.b16 %v118
    %v608 = vunpack.c.h.b16 %v118
    %v609 = vunpack.c.l.b16 %v119
    %v610 = vunpack.c.h.b16 %v119
    %v611 = vunpack.c.l.b16 %v120
    %v612 = vunpack.c.h.b16 %v120
    %v613 = vunpack.c.l.b16 %v121
    %v614 = vunpack.c.h.b16 %v121
    %v615 = vunpack.c.l.b16 %v122
    %v616 = vunpack.c.h.b16 %v122
    %v617 = vunpack.c.l.b16 %v123
    %v618 = vunpack.c.h.b16 %v123
    %v619 = vunpack.c.l.b16 %v124
    %v620 = vunpack.c.h.b16 %v124
    %v621 = vunpack.c.l.b16 %v125
    %v622 = vunpack.c.h.b16 %v125
    %v623 = vunpack.c.l.b16 %v126
    %v624 = vunpack.c.h.b16 %v126
    %v625 = vunpack.c.l.b16 %v127
    %v626 = vunpack.c.h.b16 %v127
    %v627 = vunpack.c.l.b16 %v128
    %v628 = vunpack.c.h.b16 %v128
    %v629 = vunpack.c.l.b16 %v129
    %v630 = vunpack.c.h.b16 %v129
    %v631 = vunpack.c.l.b16 %v130
    %v632 = vunpack.c.h.b16 %v130
    %v633 = vunpack.c.l.b16 %v131
    %v634 = vunpack.c.h.b16 %v131
    %v635 = vunpack.c.l.b16 %v132
    %v636 = vunpack.c.h.b16 %v132
    %v637 = vunpack.c.l.b16 %v133
    %v638 = vunpack.c.h.b16 %v133
    %v639 = vunpack.c.l.b16 %v134
    %v640 = vunpack.c.h.b16 %v134
    %v641 = vunpack.c.l.b16 %v135
    %v642 = vunpack.c.h.b16 %v135
    %v643 = vunpack.c.l.b16 %v136
    %v644 = vunpack.c.h.b16 %v136
    %v645 = vunpack.c.l.b16 %v137
    %v646 = vunpack.c.h.b16 %v137
    %v647 = vunpack.c.l.b16 %v138
    %v648 = vunpack.c.h.b16 %v138
    %v649 = vunpack.c.l.b16 %v139
    %v650 = vunpack.c.h.b16 %v139
    %v651 = vunpack.c.l.b16 %v140
    %v652 = vunpack.c.h.b16 %v140
    %v653 = vunpack.c.l.b16 %v141
    %v654 = vunpack.c.h.b16 %v141
    %v655 = vunpack.c.l.b16 %v142
    %v656 = vunpack.c.h.b16 %v142
    %v657 = vunpack.c.l.b16 %v143
    %v658 = vunpack.c.h.b16 %v143
    %v659 = vunpack.c.l.b16 %v144
    %v660 = vunpack.c.h.b16 %v144
    %v661 = vunpack.c.l.b16 %v145
    %v662 = vunpack.c.h.b16 %v145
    %v663 = vunpack.c.l.b16 %v146
    %v664 = vunpack.c.h.b16 %v146
    %v665 = vunpack.c.l.b16 %v147
    %v666 = vunpack.c.h.b16 %v147
    %v667 = vunpack.c.l.b16 %v148
    %v668 = vunpack.c.h.b16 %v148
    %v669 = vunpack.c.l.b16 %v149
    %v670 = vunpack.c.h.b16 %v149
    %v671 = vunpack.c.l.b16 %v150
    %v672 = vunpack.c.h.b16 %v150
    %v673 = vunpack.c.l.b16 %v151
    %v674 = vunpack.c.h.b16 %v151
    %v675 = vunpack.c.l.b16 %v152
    %v676 = vunpack.c.h.b16 %v152
    %v677 = vunpack.c.l.b16 %v153
    %v678 = vunpack.c.h.b16 %v153
    %v679 = vunpack.c.l.b16 %v154
    %v680 = vunpack.c.h.b16 %v154
    %v681 = vunpack.c.l.b16 %v155
    %v682 = vunpack.c.h.b16 %v155
    %v683 = vunpack.c.l.b16 %v156
    %v684 = vunpack.c.h.b16 %v156
    %v685 = vunpack.c.l.b16 %v157
    %v686 = vunpack.c.h.b16 %v157
    %v687 = vunpack.c.l.b16 %v158
    %v688 = vunpack.c.h.b16 %v158
    %v689 = vunpack.c.l.b16 %v159
    %v690 = vunpack.c.h.b16 %v159
    %v691 = vunpack.c.l.b16 %v160
    %v692 = vunpack.c.h.b16 %v160
    %v693 = vunpack.c.l.b16 %v161
    %v694 = vunpack.c.h.b16 %v161
    %v695 = vunpack.c.l.b16 %v162
    %v696 = vunpack.c.h.b16 %v162
    %v697 = vunpack.c.l.b16 %v163
    %v698 = vunpack.c.h.b16 %v163
    %v699 = vunpack.c.l.b16 %v164
    %v700 = vunpack.c.h.b16 %v164
    %v701 = vunpack.c.l.b16 %v165
    %v702 = vunpack.c.h.b16 %v165
    %v703 = vunpack.c.l.b16 %v166
    %v704 = vunpack.c.h.b16 %v166
    %v705 = vunpack.c.l.b16 %v167
    %v706 = vunpack.c.h.b16 %v167
    %v707 = vunpack.c.l.b16 %v168
    %v708 = vunpack.c.h.b16 %v168
    %v709 = vunpack.c.l.b16 %v169
    %v710 = vunpack.c.h.b16 %v169
    %v711 = vunpack.c.l.b16 %v170
    %v712 = vunpack.c.h.b16 %v170
    %v713 = vunpack.c.l.b16 %v171
    %v714 = vunpack.c.h.b16 %v171
    %v715 = vunpack.c.l.b16 %v172
    %v716 = vunpack.c.h.b16 %v172
    %v717 = vunpack.c.l.b16 %v173
    %v718 = vunpack.c.h.b16 %v173
    %v719 = vunpack.c.l.b16 %v174
    %v720 = vunpack.c.h.b16 %v174
    %v721 = vunpack.c.l.b16 %v175
    %v722 = vunpack.c.h.b16 %v175
    %v723 = vunpack.c.l.b16 %v176
    %v724 = vunpack.c.h.b16 %v176
    %v725 = vunpack.c.l.b16 %v177
    %v726 = vunpack.c.h.b16 %v177
    %v727 = vunpack.c.l.b16 %v178
    %v728 = vunpack.c.h.b16 %v178
    %v729 = vunpack.c.l.b16 %v179
    %v730 = vunpack.c.h.b16 %v179
    %v731 = vunpack.c.l.b16 %v180
    %v732 = vunpack.c.h.b16 %v180
    %v733 = vunpack.c.l.b16 %v181
    %v734 = vunpack.c.h.b16 %v181
    %v735 = vunpack.c.l.b16 %v182
    %v736 = vunpack.c.h.b16 %v182
    %v737 = vunpack.c.l.b16 %v183
    %v738 = vunpack.c.h.b16 %v183
    %v739 = vunpack.c.l.b16 %v184
    %v740 = vunpack.c.h.b16 %v184
    %v741 = vunpack.c.l.b16 %v185
    %v742 = vunpack.c.h.b16 %v185
    %v743 = vunpack.c.l.b16 %v186
    %v744 = vunpack.c.h.b16 %v186
    %v745 = vunpack.c.l.b16 %v187
    %v746 = vunpack.c.h.b16 %v187
    %v747 = vunpack.c.l.b16 %v188
    %v748 = vunpack.c.h.b16 %v188
    %v749 = vunpack.c.l.b16 %v189
    %v750 = vunpack.c.h.b16 %v189
    %v751 = vunpack.c.l.b16 %v190
    %v752 = vunpack.c.h.b16 %v190
    %v753 = vunpack.c.l.b16 %v191
    %v754 = vunpack.c.h.b16 %v191
    %v755 = vunpack.c.l.b16 %v192
    %v756 = vunpack.c.h.b16 %v192
    %v757 = vunpack.c.l.b16 %v193
    %v758 = vunpack.c.h.b16 %v193
    %v759 = vunpack.c.l.b16 %v194
    %v760 = vunpack.c.h.b16 %v194
    %v761 = vunpack.c.l.b16 %v195
    %v762 = vunpack.c.h.b16 %v195
    %v763 = vunpack.c.l.b16 %v196
    %v764 = vunpack.c.h.b16 %v196
    %v765 = vunpack.c.l.b16 %v197
    %v766 = vunpack.c.h.b16 %v197
    %v767 = vunpack.c.l.b16 %v198
    %v768 = vunpack.c.h.b16 %v198
    %v769 = vunpack.c.l.b16 %v199
    %v770 = vunpack.c.h.b16 %v199
    %v771 = vunpack.c.l.b16 %v200
    %v772 = vunpack.c.h.b16 %v200
    %v773 = vunpack.c.l.b16 %v201
    %v774 = vunpack.c.h.b16 %v201
    %v775 = vunpack.c.l.b16 %v202
    %v776 = vunpack.c.h.b16 %v202
    %v777 = vunpack.c.l.b16 %v203
    %v778 = vunpack.c.h.b16 %v203
    %v779 = vunpack.c.l.b16 %v204
    %v780 = vunpack.c.h.b16 %v204
    %v781 = vunpack.c.l.b16 %v205
    %v782 = vunpack.c.h.b16 %v205
    %v783 = vunpack.c.l.b16 %v206
    %v784 = vunpack.c.h.b16 %v206
    %v785 = vunpack.c.l.b16 %v207
    %v786 = vunpack.c.h.b16 %v207
    %v787 = vunpack.c.l.b16 %v208
    %v788 = vunpack.c.h.b16 %v208
    %v789 = vunpack.c.l.b16 %v209
    %v790 = vunpack.c.h.b16 %v209
    %v791 = vunpack.c.l.b16 %v210
    %v792 = vunpack.c.h.b16 %v210
    %v793 = vunpack.c.l.b16 %v211
    %v794 = vunpack.c.h.b16 %v211
    %v795 = vunpack.c.l.b16 %v212
    %v796 = vunpack.c.h.b16 %v212
    %v797 = vunpack.c.l.b16 %v213
    %v798 = vunpack.c.h.b16 %v213
    %v799 = vunpack.c.l.b16 %v214
    %v800 = vunpack.c.h.b16 %v214
    %v801 = vunpack.c.l.b16 %v215
    %v802 = vunpack.c.h.b16 %v215
    %v803 = vunpack.c.l.b16 %v216
    %v804 = vunpack.c.h.b16 %v216
    %v805 = vunpack.c.l.b16 %v217
    %v806 = vunpack.c.h.b16 %v217
    %v807 = vunpack.c.l.b16 %v218
    %v808 = vunpack.c.h.b16 %v218
    %v809 = vunpack.c.l.b16 %v219
    %v810 = vunpack.c.h.b16 %v219
    %v811 = vunpack.c.l.b16 %v220
    %v812 = vunpack.c.h.b16 %v220
    %v813 = vunpack.c.l.b16 %v221
    %v814 = vunpack.c.h.b16 %v221
    %v815 = vunpack.c.l.b16 %v222
    %v816 = vunpack.c.h.b16 %v222
    %v817 = vunpack.c.l.b16 %v223
    %v818 = vunpack.c.h.b16 %v223
    %v819 = vunpack.c.l.b16 %v224
    %v820 = vunpack.c.h.b16 %v224
    %v821 = vunpack.c.l.b16 %v225
    %v822 = vunpack.c.h.b16 %v225
    %v823 = vunpack.c.l.b16 %v226
    %v824 = vunpack.c.h.b16 %v226
    %v825 = vunpack.c.l.b16 %v227
    %v826 = vunpack.c.h.b16 %v227
    %v827 = vunpack.c.l.b16 %v228
    %v828 = vunpack.c.h.b16 %v228
    %v829 = vunpack.c.l.b16 %v229
    %v830 = vunpack.c.h.b16 %v229
    %v831 = vunpack.c.l.b16 %v230
    %v832 = vunpack.c.h.b16 %v230
    %v833 = vunpack.c.l.b16 %v231
    %v834 = vunpack.c.h.b16 %v231
    %v835 = vunpack.c.l.b16 %v232
    %v836 = vunpack.c.h.b16 %v232
    %v837 = vunpack.c.l.b16 %v233
    %v838 = vunpack.c.h.b16 %v233
    %v839 = vunpack.c.l.b16 %v234
    %v840 = vunpack.c.h.b16 %v234
    %v841 = vunpack.c.l.b16 %v235
    %v842 = vunpack.c.h.b16 %v235
    %v843 = vunpack.c.l.b16 %v236
    %v844 = vunpack.c.h.b16 %v236
    %v845 = vunpack.c.l.b16 %v237
    %v846 = vunpack.c.h.b16 %v237
    %v847 = vunpack.c.l.b16 %v238
    %v848 = vunpack.c.h.b16 %v238
    %v849 = vunpack.c.l.b16 %v239
    %v850 = vunpack.c.h.b16 %v239
    %v851 = vunpack.c.l.b16 %v240
    %v852 = vunpack.c.h.b16 %v240
    %v853 = vunpack.c.l.b16 %v241
    %v854 = vunpack.c.h.b16 %v241
    %v855 = vunpack.c.l.b16 %v242
    %v856 = vunpack.c.h.b16 %v242
    %v857 = vunpack.c.l.b16 %v243
    %v858 = vunpack.c.h.b16 %v243
    %v859 = vunpack.c.l.b16 %v244
    %v860 = vunpack.c.h.b16 %v244
    %v861 = vunpack.c.l.b16 %v245
    %v862 = vunpack.c.h.b16 %v245
    %v863 = vunpack.c.l.b16 %v246
    %v864 = vunpack.c.h.b16 %v246
    %v865 = vunpack.c.l.b16 %v247
    %v866 = vunpack.c.h.b16 %v247
    %v867 = vunpack.c.l.b16 %v248
    %v868 = vunpack.c.h.b16 %v248
    %v869 = vunpack.c.l.b16 %v249
    %v870 = vunpack.c.h.b16 %v249
    %v871 = vunpack.c.l.b16 %v250
    %v872 = vunpack.c.h.b16 %v250
    %v873 = vunpack.c.l.b16 %v251
    %v874 = vunpack.c.h.b16 %v251
    %v875 = vunpack.c.l.b16 %v252
    %v876 = vunpack.c.h.b16 %v252
    %v877 = vunpack.c.l.b16 %v253
    %v878 = vunpack.c.h.b16 %v253
    %v879 = vunpack.c.l.b16 %v254
    %v880 = vunpack.c.h.b16 %v254
    %v881 = vunpack.c.l.b16 %v255
    %v882 = vunpack.c.h.b16 %v255
    %v883 = vunpack.c.l.b16 %v256
    %v884 = vunpack.c.h.b16 %v256
    %v885 = vunpack.c.l.b16 %v257
    %v886 = vunpack.c.h.b16 %v257
    %v887 = vunpack.c.l.b16 %v258
    %v888 = vunpack.c.h.b16 %v258
    %v889 = vunpack.c.l.b16 %v259
    %v890 = vunpack.c.h.b16 %v259
    %v891 = vunpack.c.l.b16 %v260
    %v892 = vunpack.c.h.b16 %v260
    %v893 = vunpack.c.l.b16 %v261
    %v894 = vunpack.c.h.b16 %v261
    %v895 = vunpack.c.l.b16 %v262
    %v896 = vunpack.c.h.b16 %v262
    %v897 = vunpack.c.l.b16 %v263
    %v898 = vunpack.c.h.b16 %v263
    %v899 = vunpack.c.l.b16 %v264
    %v900 = vunpack.c.h.b16 %v264
    %v901 = vunpack.c.l.b16 %v265
    %v902 = vunpack.c.h.b16 %v265
    %v903 = vunpack.c.l.b16 %v266
    %v904 = vunpack.c.h.b16 %v266
    %v905 = vunpack.c.l.b16 %v267
    %v906 = vunpack.c.h.b16 %v267
    %v907 = vunpack.c.l.b16 %v268
    %v908 = vunpack.c.h.b16 %v268
    %v909 = vunpack.c.l.b16 %v269
    %v910 = vunpack.c.h.b16 %v269
    %v911 = vunpack.c.l.b16 %v270
    %v912 = vunpack.c.h.b16 %v270
    %v913 = vunpack.c.l.b16 %v271
    %v914 = vunpack.c.h.b16 %v271
    %v915 = vunpack.c.l.b16 %v272
    %v916 = vunpack.c.h.b16 %v272
    %v917 = vunpack.c.l.b16 %v273
    %v918 = vunpack.c.h.b16 %v273
    %v919 = vpack.c.b16 %v531, %v527
    %v920 = vpack.c.b16 %v532, %v528
    %v921 = vpack.c.b16 %v533, %v529
    %v922 = vpack.c.b16 %v534, %v530
    %v923 = vpack.c.b16 %v539, %v535
    %v924 = vpack.c.b16 %v540, %v536
    %v925 = vpack.c.b16 %v541, %v537
    %v926 = vpack.c.b16 %v542, %v538
    %v927 = vpack.c.b16 %v547, %v543
    %v928 = vpack.c.b16 %v548, %v544
    %v929 = vpack.c.b16 %v549, %v545
    %v930 = vpack.c.b16 %v550, %v546
    %v931 = vpack.c.b16 %v555, %v551
    %v932 = vpack.c.b16 %v556, %v552
    %v933 = vpack.c.b16 %v557, %v553
    %v934 = vpack.c.b16 %v558, %v554
    %v935 = vpack.c.b16 %v563, %v559
    %v936 = vpack.c.b16 %v564, %v560
    %v937 = vpack.c.b16 %v565, %v561
    %v938 = vpack.c.b16 %v566, %v562
    %v939 = vpack.c.b16 %v571, %v567
    %v940 = vpack.c.b16 %v572, %v568
    %v941 = vpack.c.b16 %v573, %v569
    %v942 = vpack.c.b16 %v574, %v570
    %v943 = vpack.c.b16 %v579, %v575
    %v944 = vpack.c.b16 %v580, %v576
    %v945 = vpack.c.b16 %v581, %v577
    %v946 = vpack.c.b16 %v582, %v578
    %v947 = vpack.c.b16 %v587, %v583
    %v948 = vpack.c.b16 %v588, %v584
    %v949 = vpack.c.b16 %v589, %v585
    %v950 = vpack.c.b16 %v590, %v586
    %v951 = vpack.c.b16 %v595, %v591
    %v952 = vpack.c.b16 %v596, %v592
    %v953 = vpack.c.b16 %v597, %v593
    %v954 = vpack.c.b16 %v598, %v594
    %v955 = vpack.c.b16 %v603, %v599
    %v956 = vpack.c.b16 %v604, %v600
    %v957 = vpack.c.b16 %v605, %v601
    %v958 = vpack.c.b16 %v606, %v602
    %v959 = vpack.c.b16 %v611, %v607
    %v960 = vpack.c.b16 %v612, %v608
    %v961 = vpack.c.b16 %v613, %v609
    %v962 = vpack.c.b16 %v614, %v610
    %v963 = vpack.c.b16 %v619, %v615
    %v964 = vpack.c.b16 %v620, %v616
    %v965 = vpack.c.b16 %v621, %v617
    %v966 = vpack.c.b16 %v622, %v618
    %v967 = vpack.c.b16 %v627, %v623
    %v968 = vpack.c.b16 %v628, %v624
    %v969 = vpack.c.b16 %v629, %v625
    %v970 = vpack.c.b16 %v630, %v626
    %v971 = vpack.c.b16 %v635, %v631
    %v972 = vpack.c.b16 %v636, %v632
    %v973 = vpack.c.b16 %v637, %v633
    %v974 = vpack.c.b16 %v638, %v634
    %v975 = vpack.c.b16 %v643, %v639
    %v976 = vpack.c.b16 %v644, %v640
    %v977 = vpack.c.b16 %v645, %v641
    %v978 = vpack.c.b16 %v646, %v642
    %v979 = vpack.c.b16 %v651, %v647
    %v980 = vpack.c.b16 %v652, %v648
    %v981 = vpack.c.b16 %v653, %v649
    %v982 = vpack.c.b16 %v654, %v650
    %v983 = vpack.c.b16 %v659, %v655
    %v984 = vpack.c.b16 %v660, %v656
    %v985 = vpack.c.b16 %v661, %v657
    %v986 = vpack.c.b16 %v662, %v658
    %v987 = vpack.c.b16 %v667, %v663
    %v988 = vpack.c.b16 %v668, %v664
    %v989 = vpack.c.b16 %v669, %v665
    %v990 = vpack.c.b16 %v670, %v666
    %v991 = vpack.c.b16 %v675, %v671
    %v992 = vpack.c.b16 %v676, %v672
    %v993 = vpack.c.b16 %v677, %v673
    %v994 = vpack.c.b16 %v678, %v674
    %v995 = vpack.c.b16 %v683, %v679
    %v996 = vpack.c.b16 %v684, %v680
    %v997 = vpack.c.b16 %v685, %v681
    %v998 = vpack.c.b16 %v686, %v682
    %v999 = vpack.c.b16 %v691, %v687
    %v1000 = vpack.c.b16 %v692, %v688
    %v1001 = vpack.c.b16 %v693, %v689
    %v1002 = vpack.c.b16 %v694, %v690
    %v1003 = vpack.c.b16 %v699, %v695
    %v1004 = vpack.c.b16 %v700, %v696
    %v1005 = vpack.c.b16 %v701, %v697
    %v1006 = vpack.c.b16 %v702, %v698
    %v1007 = vpack.c.b16 %v707, %v703
    %v1008 = vpack.c.b16 %v708, %v704
    %v1009 = vpack.c.b16 %v709, %v705
    %v1010 = vpack.c.b16 %v710, %v706
    %v1011 = vpack.c.b16 %v715, %v711
    %v1012 = vpack.c.b16 %v716, %v712
    %v1013 = vpack.c.b16 %v717, %v713
    %v1014 = vpack.c.b16 %v718, %v714
    %v1015 = vpack.c.b16 %v723, %v719
    %v1016 = vpack.c.b16 %v724, %v720
    %v1017 = vpack.c.b16 %v725, %v721
    %v1018 = vpack.c.b16 %v726, %v722
    %v1019 = vpack.c.b16 %v731, %v727
    %v1020 = vpack.c.b16 %v732, %v728
    %v1021 = vpack.c.b16 %v733, %v729
    %v1022 = vpack.c.b16 %v734, %v730
    %v1023 = vpack.c.b16 %v739, %v735
    %v1024 = vpack.c.b16 %v740, %v736
    %v1025 = vpack.c.b16 %v741, %v737
    %v1026 = vpack.c.b16 %v742, %v738
    %v1027 = vpack.c.b16 %v747, %v743
    %v1028 = vpack.c.b16 %v748, %v744
    %v1029 = vpack.c.b16 %v749, %v745
    %v1030 = vpack.c.b16 %v750, %v746
    %v1031 = vpack.c.b16 %v755, %v751
    %v1032 = vpack.c.b16 %v756, %v752
    %v1033 = vpack.c.b16 %v757, %v753
    %v1034 = vpack.c.b16 %v758, %v754
    %v1035 = vpack.c.b16 %v763, %v759
    %v1036 = vpack.c.b16 %v764, %v760
    %v1037 = vpack.c.b16 %v765, %v761
    %v1038 = vpack.c.b16 %v766, %v762
    %v1039 = vpack.c.b16 %v771, %v767
    %v1040 = vpack.c.b16 %v772, %v768
    %v1041 = vpack.c.b16 %v773, %v769
    %v1042 = vpack.c.b16 %v774, %v770
    %v1043 = vpack.c.b16 %v779, %v775
    %v1044 = vpack.c.b16 %v780, %v776
    %v1045 = vpack.c.b16 %v781, %v777
    %v1046 = vpack.c.b16 %v782, %v778
    %v1047 = vpack.c.b16 %v787, %v783
    %v1048 = vpack.c.b16 %v788, %v784
    %v1049 = vpack.c.b16 %v789, %v785
    %v1050 = vpack.c.b16 %v790, %v786
    %v1051 = vpack.c.b16 %v795, %v791
    %v1052 = vpack.c.b16 %v796, %v792
    %v1053 = vpack.c.b16 %v797, %v793
    %v1054 = vpack.c.b16 %v798, %v794
    %v1055 = vpack.c.b16 %v803, %v799
    %v1056 = vpack.c.b16 %v804, %v800
    %v1057 = vpack.c.b16 %v805, %v801
    %v1058 = vpack.c.b16 %v806, %v802
    %v1059 = vpack.c.b16 %v811, %v807
    %v1060 = vpack.c.b16 %v812, %v808
    %v1061 = vpack.c.b16 %v813, %v809
    %v1062 = vpack.c.b16 %v814, %v810
    %v1063 = vpack.c.b16 %v819, %v815
    %v1064 = vpack.c.b16 %v820, %v816
    %v1065 = vpack.c.b16 %v821, %v817
    %v1066 = vpack.c.b16 %v822, %v818
    %v1067 = vpack.c.b16 %v827, %v823
    %v1068 = vpack.c.b16 %v828, %v824
    %v1069 = vpack.c.b16 %v829, %v825
    %v1070 = vpack.c.b16 %v830, %v826
    %v1071 = vpack.c.b16 %v835, %v831
    %v1072 = vpack.c.b16 %v836, %v832
    %v1073 = vpack.c.b16 %v837, %v833
    %v1074 = vpack.c.b16 %v838, %v834
    %v1075 = vpack.c.b16 %v843, %v839
    %v1076 = vpack.c.b16 %v844, %v840
    %v1077 = vpack.c.b16 %v845, %v841
    %v1078 = vpack.c.b16 %v846, %v842
    %v1079 = vpack.c.b16 %v851, %v847
    %v1080 = vpack.c.b16 %v852, %v848
    %v1081 = vpack.c.b16 %v853, %v849
    %v1082 = vpack.c.b16 %v854, %v850
    %v1083 = vpack.c.b16 %v859, %v855
    %v1084 = vpack.c.b16 %v860, %v856
    %v1085 = vpack.c.b16 %v861, %v857
    %v1086 = vpack.c.b16 %v862, %v858
    %v1087 = vpack.c.b16 %v867, %v863
    %v1088 = vpack.c.b16 %v868, %v864
    %v1089 = vpack.c.b16 %v869, %v865
    %v1090 = vpack.c.b16 %v870, %v866
    %v1091 = vpack.c.b16 %v875, %v871
    %v1092 = vpack.c.b16 %v876, %v872
    %v1093 = vpack.c.b16 %v877, %v873
    %v1094 = vpack.c.b16 %v878, %v874
    %v1095 = vpack.c.b16 %v883, %v879
    %v1096 = vpack.c.b16 %v884, %v880
    %v1097 = vpack.c.b16 %v885, %v881
    %v1098 = vpack.c.b16 %v886, %v882
    %v1099 = vpack.c.b16 %v891, %v887
    %v1100 = vpack.c.b16 %v892, %v888
    %v1101 = vpack.c.b16 %v893, %v889
    %v1102 = vpack.c.b16 %v894, %v890
    %v1103 = vpack.c.b16 %v899, %v895
    %v1104 = vpack.c.b16 %v900, %v896
    %v1105 = vpack.c.b16 %v901, %v897
    %v1106 = vpack.c.b16 %v902, %v898
    %v1107 = vpack.c.b16 %v907, %v903
    %v1108 = vpack.c.b16 %v908, %v904
    %v1109 = vpack.c.b16 %v909, %v905
    %v1110 = vpack.c.b16 %v910, %v906
    %v1111 = vpack.c.b16 %v915, %v911
    %v1112 = vpack.c.b16 %v916, %v912
    %v1113 = vpack.c.b16 %v917, %v913
    %v1114 = vpack.c.b16 %v918, %v914
    %vm1311 = vcmask 130048
    %v1313 = vsel %vm1311, %v324, 0
    %1315 = vmatprep.subr.bf16.mxu0 %v948
    %1316 = vmatpush1.bf16.msra.mxu0 %v947
    %1317 = vmatprep.subr.bf16.mxu0 %v944
    %1318 = vmatpush1.bf16.msra.mxu0 %v943
    %1319 = vmatprep.subr.bf16.mxu0 %v940
    %1320 = vmatpush1.bf16.msra.mxu0 %v939
    %1321 = vmatprep.subr.bf16.mxu0 %v936
    %1322 = vmatpush1.bf16.msra.mxu0 %v935
    %1323 = vmatprep.subr.bf16.mxu0 %v932
    %1324 = vmatpush1.bf16.msra.mxu0 %v931
    %1325 = vmatprep.subr.bf16.mxu0 %v928
    %1326 = vmatpush1.bf16.msra.mxu0 %v927
    %1327 = vmatprep.subr.bf16.mxu0 %v924
    %1328 = vmatpush1.bf16.msra.mxu0 %v923
    %1329 = vmatprep.subr.bf16.mxu0 %v920
    %1330 = vmatpush1.bf16.msra.mxu0 %v919
    %1331 = vmatprep.subr.bf16.mxu0 %v980
    %1332 = vmatpush2.bf16.msra.mxu0 %v979
    %1333 = vmatprep.subr.bf16.mxu0 %v976
    %1334 = vmatpush2.bf16.msra.mxu0 %v975
    %1335 = vmatprep.subr.bf16.mxu0 %v972
    %1336 = vmatpush2.bf16.msra.mxu0 %v971
    %1337 = vmatprep.subr.bf16.mxu0 %v968
    %1338 = vmatpush2.bf16.msra.mxu0 %v967
    %1339 = vmatprep.subr.bf16.mxu0 %v964
    %1340 = vmatpush2.bf16.msra.mxu0 %v963
    %1341 = vmatprep.subr.bf16.mxu0 %v960
    %1342 = vmatpush2.bf16.msra.mxu0 %v959
    %1343 = vmatprep.subr.bf16.mxu0 %v956
    %1344 = vmatpush2.bf16.msra.mxu0 %v955
    %1345 = vmatprep.subr.bf16.mxu0 %v952
    %1346 = vmatpush2.bf16.msra.mxu0 %v951
    %1347 = vmatprep.mubr.bf16.mxu0 %v319
    %1348 = vmatmul.mubr.bf16.gmra.mxu0 %v318
    %v1349 = vpop.f32.mrf.mxu0
    %v1350 = vadd.f32 %v279, %v1349
    %v1351 = vpop.f32.mrf.mxu0
    %v1352 = vadd.f32 %v283, %v1351
    %v1353 = vpop.f32.mrf.mxu0
    %v1354 = vadd.f32 %v279, %v1353
    %v1355 = vpop.f32.mrf.mxu0
    %v1356 = vadd.f32 %v283, %v1355
    %1357 = vdwg.mxu0
    %1358 = vmatprep.subr.bf16.mxu0 %v1012
    %1359 = vmatpush1.bf16.msra.mxu0 %v1011
    %1360 = vmatprep.subr.bf16.mxu0 %v1008
    %1361 = vmatpush1.bf16.msra.mxu0 %v1007
    %1362 = vmatprep.subr.bf16.mxu0 %v1004
    %1363 = vmatpush1.bf16.msra.mxu0 %v1003
    %1364 = vmatprep.subr.bf16.mxu0 %v1000
    %1365 = vmatpush1.bf16.msra.mxu0 %v999
    %1366 = vmatprep.subr.bf16.mxu0 %v996
    %1367 = vmatpush1.bf16.msra.mxu0 %v995
    %1368 = vmatprep.subr.bf16.mxu0 %v992
    %1369 = vmatpush1.bf16.msra.mxu0 %v991
    %1370 = vmatprep.subr.bf16.mxu0 %v988
    %1371 = vmatpush1.bf16.msra.mxu0 %v987
    %1372 = vmatprep.subr.bf16.mxu0 %v984
    %1373 = vmatpush1.bf16.msra.mxu0 %v983
    %1374 = vmatprep.subr.bf16.mxu0 %v1044
    %1375 = vmatpush2.bf16.msra.mxu0 %v1043
    %1376 = vmatprep.subr.bf16.mxu0 %v1040
    %1377 = vmatpush2.bf16.msra.mxu0 %v1039
    %1378 = vmatprep.subr.bf16.mxu0 %v1036
    %1379 = vmatpush2.bf16.msra.mxu0 %v1035
    %1380 = vmatprep.subr.bf16.mxu0 %v1032
    %1381 = vmatpush2.bf16.msra.mxu0 %v1031
    %1382 = vmatprep.subr.bf16.mxu0 %v1028
    %1383 = vmatpush2.bf16.msra.mxu0 %v1027
    %1384 = vmatprep.subr.bf16.mxu0 %v1024
    %1385 = vmatpush2.bf16.msra.mxu0 %v1023
    %1386 = vmatprep.subr.bf16.mxu0 %v1020
    %1387 = vmatpush2.bf16.msra.mxu0 %v1019
    %1388 = vmatprep.subr.bf16.mxu0 %v1016
    %1389 = vmatpush2.bf16.msra.mxu0 %v1015
    %1390 = vmatprep.mubr.bf16.mxu0 %v321
    %1391 = vmatmul.mubr.bf16.gmra.mxu0 %v320
    %v1392 = vpop.f32.mrf.mxu0
    %v1393 = vadd.f32 %v1350, %v1392
    %v1394 = vpop.f32.mrf.mxu0
    %v1395 = vadd.f32 %v1352, %v1394
    %v1396 = vpop.f32.mrf.mxu0
    %v1397 = vadd.f32 %v1354, %v1396
    %v1398 = vpop.f32.mrf.mxu0
    %v1399 = vadd.f32 %v1356, %v1398
    %1400 = vdwg.mxu0
    %1401 = vmatprep.subr.bf16.mxu0 %v1076
    %1402 = vmatpush1.bf16.msra.mxu0 %v1075
    %1403 = vmatprep.subr.bf16.mxu0 %v1072
    %1404 = vmatpush1.bf16.msra.mxu0 %v1071
    %1405 = vmatprep.subr.bf16.mxu0 %v1068
    %1406 = vmatpush1.bf16.msra.mxu0 %v1067
    %1407 = vmatprep.subr.bf16.mxu0 %v1064
    %1408 = vmatpush1.bf16.msra.mxu0 %v1063
    %1409 = vmatprep.subr.bf16.mxu0 %v1060
    %1410 = vmatpush1.bf16.msra.mxu0 %v1059
    %1411 = vmatprep.subr.bf16.mxu0 %v1056
    %1412 = vmatpush1.bf16.msra.mxu0 %v1055
    %1413 = vmatprep.subr.bf16.mxu0 %v1052
    %1414 = vmatpush1.bf16.msra.mxu0 %v1051
    %1415 = vmatprep.subr.bf16.mxu0 %v1048
    %1416 = vmatpush1.bf16.msra.mxu0 %v1047
    %1417 = vmatprep.subr.bf16.mxu0 %v1108
    %1418 = vmatpush2.bf16.msra.mxu0 %v1107
    %1419 = vmatprep.subr.bf16.mxu0 %v1104
    %1420 = vmatpush2.bf16.msra.mxu0 %v1103
    %1421 = vmatprep.subr.bf16.mxu0 %v1100
    %1422 = vmatpush2.bf16.msra.mxu0 %v1099
    %1423 = vmatprep.subr.bf16.mxu0 %v1096
    %1424 = vmatpush2.bf16.msra.mxu0 %v1095
    %1425 = vmatprep.subr.bf16.mxu0 %v1092
    %1426 = vmatpush2.bf16.msra.mxu0 %v1091
    %1427 = vmatprep.subr.bf16.mxu0 %v1088
    %1428 = vmatpush2.bf16.msra.mxu0 %v1087
    %1429 = vmatprep.subr.bf16.mxu0 %v1084
    %1430 = vmatpush2.bf16.msra.mxu0 %v1083
    %1431 = vmatprep.subr.bf16.mxu0 %v1080
    %1432 = vmatpush2.bf16.msra.mxu0 %v1079
    %1433 = vmatprep.mubr.bf16.mxu0 %v323
    %1434 = vmatmul.mubr.bf16.gmra.mxu0 %v322
    %v1435 = vpop.f32.mrf.mxu0
    %v1436 = vadd.f32 %v1393, %v1435
    %v1437 = vpop.f32.mrf.mxu0
    %v1438 = vadd.f32 %v1395, %v1437
    %v1439 = vpop.f32.mrf.mxu0
    %v1440 = vadd.f32 %v1397, %v1439
    %v1441 = vpop.f32.mrf.mxu0
    %v1442 = vadd.f32 %v1399, %v1441
    %1443 = vdwg.mxu0
    %1444 = vmatprep.subr.bf16.mxu0 0
    %1445 = vmatpush1.bf16.msra.mxu0 0
    %1446 = vmatprep.subr.bf16.mxu0 0
    %1447 = vmatpush1.bf16.msra.mxu0 0
    %1448 = vmatprep.subr.bf16.mxu0 0
    %1449 = vmatpush1.bf16.msra.mxu0 0
    %1450 = vmatprep.subr.bf16.mxu0 0
    %1451 = vmatpush1.bf16.msra.mxu0 0
    %1452 = vmatprep.subr.bf16.mxu0 0
    %1453 = vmatpush1.bf16.msra.mxu0 0
    %1454 = vmatprep.subr.bf16.mxu0 0
    %1455 = vmatpush1.bf16.msra.mxu0 0
    %1456 = vmatprep.subr.bf16.mxu0 0
    %1457 = vmatpush1.bf16.msra.mxu0 0
    %1458 = vmatprep.subr.bf16.mxu0 %v1112
    %1459 = vmatpush1.bf16.msra.mxu0 %v1111
    %1460 = vmatprep.subr.bf16.mxu0 0
    %1461 = vmatpush2.bf16.msra.mxu0 0
    %1462 = vmatprep.subr.bf16.mxu0 0
    %1463 = vmatpush2.bf16.msra.mxu0 0
    %1464 = vmatprep.subr.bf16.mxu0 0
    %1465 = vmatpush2.bf16.msra.mxu0 0
    %1466 = vmatprep.subr.bf16.mxu0 0
    %1467 = vmatpush2.bf16.msra.mxu0 0
    %1468 = vmatprep.subr.bf16.mxu0 0
    %1469 = vmatpush2.bf16.msra.mxu0 0
    %1470 = vmatprep.subr.bf16.mxu0 0
    %1471 = vmatpush2.bf16.msra.mxu0 0
    %1472 = vmatprep.subr.bf16.mxu0 0
    %1473 = vmatpush2.bf16.msra.mxu0 0
    %1474 = vmatprep.subr.bf16.mxu0 0
    %1475 = vmatpush2.bf16.msra.mxu0 0
    %1476 = vmatprep.mubr.bf16.mxu0 0
    %1477 = vmatmul.mubr.bf16.gmra.mxu0 %v1313
    %v1478 = vpop.f32.mrf.mxu0
    %v1479 = vadd.f32 %v1436, %v1478
    %v1480 = vpop.f32.mrf.mxu0
    %v1481 = vadd.f32 %v1438, %v1480
    %v1482 = vpop.f32.mrf.mxu0
    %v1483 = vadd.f32 %v1440, %v1482
    %v1484 = vpop.f32.mrf.mxu0
    %v1485 = vadd.f32 %v1442, %v1484
    %1486 = vdwg.mxu0
    %1487 = vmatprep.subr.bf16.mxu0 %v950
    %1488 = vmatpush1.bf16.msra.mxu0 %v949
    %1489 = vmatprep.subr.bf16.mxu0 %v946
    %1490 = vmatpush1.bf16.msra.mxu0 %v945
    %1491 = vmatprep.subr.bf16.mxu0 %v942
    %1492 = vmatpush1.bf16.msra.mxu0 %v941
    %1493 = vmatprep.subr.bf16.mxu0 %v938
    %1494 = vmatpush1.bf16.msra.mxu0 %v937
    %1495 = vmatprep.subr.bf16.mxu0 %v934
    %1496 = vmatpush1.bf16.msra.mxu0 %v933
    %1497 = vmatprep.subr.bf16.mxu0 %v930
    %1498 = vmatpush1.bf16.msra.mxu0 %v929
    %1499 = vmatprep.subr.bf16.mxu0 %v926
    %1500 = vmatpush1.bf16.msra.mxu0 %v925
    %1501 = vmatprep.subr.bf16.mxu0 %v922
    %1502 = vmatpush1.bf16.msra.mxu0 %v921
    %1503 = vmatprep.subr.bf16.mxu0 %v982
    %1504 = vmatpush2.bf16.msra.mxu0 %v981
    %1505 = vmatprep.subr.bf16.mxu0 %v978
    %1506 = vmatpush2.bf16.msra.mxu0 %v977
    %1507 = vmatprep.subr.bf16.mxu0 %v974
    %1508 = vmatpush2.bf16.msra.mxu0 %v973
    %1509 = vmatprep.subr.bf16.mxu0 %v970
    %1510 = vmatpush2.bf16.msra.mxu0 %v969
    %1511 = vmatprep.subr.bf16.mxu0 %v966
    %1512 = vmatpush2.bf16.msra.mxu0 %v965
    %1513 = vmatprep.subr.bf16.mxu0 %v962
    %1514 = vmatpush2.bf16.msra.mxu0 %v961
    %1515 = vmatprep.subr.bf16.mxu0 %v958
    %1516 = vmatpush2.bf16.msra.mxu0 %v957
    %1517 = vmatprep.subr.bf16.mxu0 %v954
    %1518 = vmatpush2.bf16.msra.mxu0 %v953
    %1519 = vmatprep.mubr.bf16.mxu0 %v319
    %1520 = vmatmul.mubr.bf16.gmra.mxu0 %v318
    %v1521 = vpop.f32.mrf.mxu0
    %v1522 = vadd.f32 %v287, %v1521
    %v1523 = vpop.f32.mrf.mxu0
    %v1524 = vadd.f32 %v291, %v1523
    %v1525 = vpop.f32.mrf.mxu0
    %v1526 = vadd.f32 %v287, %v1525
    %v1527 = vpop.f32.mrf.mxu0
    %v1528 = vadd.f32 %v291, %v1527
    %1529 = vdwg.mxu0
    %1530 = vmatprep.subr.bf16.mxu0 %v1014
    %1531 = vmatpush1.bf16.msra.mxu0 %v1013
    %1532 = vmatprep.subr.bf16.mxu0 %v1010
    %1533 = vmatpush1.bf16.msra.mxu0 %v1009
    %1534 = vmatprep.subr.bf16.mxu0 %v1006
    %1535 = vmatpush1.bf16.msra.mxu0 %v1005
    %1536 = vmatprep.subr.bf16.mxu0 %v1002
    %1537 = vmatpush1.bf16.msra.mxu0 %v1001
    %1538 = vmatprep.subr.bf16.mxu0 %v998
    %1539 = vmatpush1.bf16.msra.mxu0 %v997
    %1540 = vmatprep.subr.bf16.mxu0 %v994
    %1541 = vmatpush1.bf16.msra.mxu0 %v993
    %1542 = vmatprep.subr.bf16.mxu0 %v990
    %1543 = vmatpush1.bf16.msra.mxu0 %v989
    %1544 = vmatprep.subr.bf16.mxu0 %v986
    %1545 = vmatpush1.bf16.msra.mxu0 %v985
    %1546 = vmatprep.subr.bf16.mxu0 %v1046
    %1547 = vmatpush2.bf16.msra.mxu0 %v1045
    %1548 = vmatprep.subr.bf16.mxu0 %v1042
    %1549 = vmatpush2.bf16.msra.mxu0 %v1041
    %1550 = vmatprep.subr.bf16.mxu0 %v1038
    %1551 = vmatpush2.bf16.msra.mxu0 %v1037
    %1552 = vmatprep.subr.bf16.mxu0 %v1034
    %1553 = vmatpush2.bf16.msra.mxu0 %v1033
    %1554 = vmatprep.subr.bf16.mxu0 %v1030
    %1555 = vmatpush2.bf16.msra.mxu0 %v1029
    %1556 = vmatprep.subr.bf16.mxu0 %v1026
    %1557 = vmatpush2.bf16.msra.mxu0 %v1025
    %1558 = vmatprep.subr.bf16.mxu0 %v1022
    %1559 = vmatpush2.bf16.msra.mxu0 %v1021
    %1560 = vmatprep.subr.bf16.mxu0 %v1018
    %1561 = vmatpush2.bf16.msra.mxu0 %v1017
    %1562 = vmatprep.mubr.bf16.mxu0 %v321
    %1563 = vmatmul.mubr.bf16.gmra.mxu0 %v320
    %v1564 = vpop.f32.mrf.mxu0
    %v1565 = vadd.f32 %v1522, %v1564
    %v1566 = vpop.f32.mrf.mxu0
    %v1567 = vadd.f32 %v1524, %v1566
    %v1568 = vpop.f32.mrf.mxu0
    %v1569 = vadd.f32 %v1526, %v1568
    %v1570 = vpop.f32.mrf.mxu0
    %v1571 = vadd.f32 %v1528, %v1570
    %1572 = vdwg.mxu0
    %1573 = vmatprep.subr.bf16.mxu0 %v1078
    %1574 = vmatpush1.bf16.msra.mxu0 %v1077
    %1575 = vmatprep.subr.bf16.mxu0 %v1074
    %1576 = vmatpush1.bf16.msra.mxu0 %v1073
    %1577 = vmatprep.subr.bf16.mxu0 %v1070
    %1578 = vmatpush1.bf16.msra.mxu0 %v1069
    %1579 = vmatprep.subr.bf16.mxu0 %v1066
    %1580 = vmatpush1.bf16.msra.mxu0 %v1065
    %1581 = vmatprep.subr.bf16.mxu0 %v1062
    %1582 = vmatpush1.bf16.msra.mxu0 %v1061
    %1583 = vmatprep.subr.bf16.mxu0 %v1058
    %1584 = vmatpush1.bf16.msra.mxu0 %v1057
    %1585 = vmatprep.subr.bf16.mxu0 %v1054
    %1586 = vmatpush1.bf16.msra.mxu0 %v1053
    %1587 = vmatprep.subr.bf16.mxu0 %v1050
    %1588 = vmatpush1.bf16.msra.mxu0 %v1049
    %1589 = vmatprep.subr.bf16.mxu0 %v1110
    %1590 = vmatpush2.bf16.msra.mxu0 %v1109
    %1591 = vmatprep.subr.bf16.mxu0 %v1106
    %1592 = vmatpush2.bf16.msra.mxu0 %v1105
    %1593 = vmatprep.subr.bf16.mxu0 %v1102
    %1594 = vmatpush2.bf16.msra.mxu0 %v1101
    %1595 = vmatprep.subr.bf16.mxu0 %v1098
    %1596 = vmatpush2.bf16.msra.mxu0 %v1097
    %1597 = vmatprep.subr.bf16.mxu0 %v1094
    %1598 = vmatpush2.bf16.msra.mxu0 %v1093
    %1599 = vmatprep.subr.bf16.mxu0 %v1090
    %1600 = vmatpush2.bf16.msra.mxu0 %v1089
    %1601 = vmatprep.subr.bf16.mxu0 %v1086
    %1602 = vmatpush2.bf16.msra.mxu0 %v1085
    %1603 = vmatprep.subr.bf16.mxu0 %v1082
    %1604 = vmatpush2.bf16.msra.mxu0 %v1081
    %1605 = vmatprep.mubr.bf16.mxu0 %v323
    %1606 = vmatmul.mubr.bf16.gmra.mxu0 %v322
    %v1607 = vpop.f32.mrf.mxu0
    %v1608 = vadd.f32 %v1565, %v1607
    %v1609 = vpop.f32.mrf.mxu0
    %v1610 = vadd.f32 %v1567, %v1609
    %v1611 = vpop.f32.mrf.mxu0
    %v1612 = vadd.f32 %v1569, %v1611
    %v1613 = vpop.f32.mrf.mxu0
    %v1614 = vadd.f32 %v1571, %v1613
    %1615 = vdwg.mxu0
    %1616 = vmatprep.subr.bf16.mxu0 0
    %1617 = vmatpush1.bf16.msra.mxu0 0
    %1618 = vmatprep.subr.bf16.mxu0 0
    %1619 = vmatpush1.bf16.msra.mxu0 0
    %1620 = vmatprep.subr.bf16.mxu0 0
    %1621 = vmatpush1.bf16.msra.mxu0 0
    %1622 = vmatprep.subr.bf16.mxu0 0
    %1623 = vmatpush1.bf16.msra.mxu0 0
    %1624 = vmatprep.subr.bf16.mxu0 0
    %1625 = vmatpush1.bf16.msra.mxu0 0
    %1626 = vmatprep.subr.bf16.mxu0 0
    %1627 = vmatpush1.bf16.msra.mxu0 0
    %1628 = vmatprep.subr.bf16.mxu0 0
    %1629 = vmatpush1.bf16.msra.mxu0 0
    %1630 = vmatprep.subr.bf16.mxu0 %v1114
    %1631 = vmatpush1.bf16.msra.mxu0 %v1113
    %1632 = vmatprep.subr.bf16.mxu0 0
    %1633 = vmatpush2.bf16.msra.mxu0 0
    %1634 = vmatprep.subr.bf16.mxu0 0
    %1635 = vmatpush2.bf16.msra.mxu0 0
    %1636 = vmatprep.subr.bf16.mxu0 0
    %1637 = vmatpush2.bf16.msra.mxu0 0
    %1638 = vmatprep.subr.bf16.mxu0 0
    %1639 = vmatpush2.bf16.msra.mxu0 0
    %1640 = vmatprep.subr.bf16.mxu0 0
    %1641 = vmatpush2.bf16.msra.mxu0 0
    %1642 = vmatprep.subr.bf16.mxu0 0
    %1643 = vmatpush2.bf16.msra.mxu0 0
    %1644 = vmatprep.subr.bf16.mxu0 0
    %1645 = vmatpush2.bf16.msra.mxu0 0
    %1646 = vmatprep.subr.bf16.mxu0 0
    %1647 = vmatpush2.bf16.msra.mxu0 0
    %1648 = vmatprep.mubr.bf16.mxu0 0
    %1649 = vmatmul.mubr.bf16.gmra.mxu0 %v1313
    %v1650 = vpop.f32.mrf.mxu0
    %v1651 = vadd.f32 %v1608, %v1650
    %v1652 = vpop.f32.mrf.mxu0
    %v1653 = vadd.f32 %v1610, %v1652
    %v1654 = vpop.f32.mrf.mxu0
    %v1655 = vadd.f32 %v1612, %v1654
    %v1656 = vpop.f32.mrf.mxu0
    %v1657 = vadd.f32 %v1614, %v1656
    %1658 = vdwg.mxu0
    %v1659 = vmul.f32 %v1479, 0.01
    %v1660 = vmul.f32 %v1481, 0.01
    %v1661 = vmul.f32 %v1651, 0.01
    %v1662 = vmul.f32 %v1653, 0.01
    %v1663 = vmul.f32 %v1483, 0.01
    %v1664 = vmul.f32 %v1485, 0.01
    %v1665 = vmul.f32 %v1655, 0.01
    %v1666 = vmul.f32 %v1657, 0.01
    %v1667 = vmax.f32 %v1479, %v1659
    %v1668 = vmax.f32 %v1481, %v1660
    %v1669 = vmax.f32 %v1651, %v1661
    %v1670 = vmax.f32 %v1653, %v1662
    %v1671 = vmax.f32 %v1483, %v1663
    %v1672 = vmax.f32 %v1485, %v1664
    %v1673 = vmax.f32 %v1655, %v1665
    %v1674 = vmax.f32 %v1657, %v1666
    %v1675 = vpack.c.bf16 %v1671, %v1667
    %v1676 = vpack.c.bf16 %v1672, %v1668
    %v1677 = vpack.c.bf16 %v1673, %v1669
    %v1678 = vpack.c.bf16 %v1674, %v1670
    %v1679 = vld [vmem:[#allocation7] sm:$0xff]
    %v1680 = vld [vmem:[#allocation7 + $0x8] sm:$0xff]
    %v1681 = vld [vmem:[#allocation7 + $0x10] sm:$0xff]
    %v1682 = vld [vmem:[#allocation7 + $0x18] sm:$0xff]
    %v1683 = vld [vmem:[#allocation7 + $0x20] sm:$0xff]
    %v1684 = vld [vmem:[#allocation7 + $0x28] sm:$0xff]
    %v1685 = vld [vmem:[#allocation7 + $0x30] sm:$0xff]
    %v1686 = vld [vmem:[#allocation7 + $0x38] sm:$0xff]
    %v1687 = vld [vmem:[#allocation7 + $0x40] sm:$0xff]
    %v1688 = vld [vmem:[#allocation7 + $0x48] sm:$0xff]
    %v1689 = vld [vmem:[#allocation7 + $0x50] sm:$0xff]
    %v1690 = vld [vmem:[#allocation7 + $0x58] sm:$0xff]
    %v1691 = vld [vmem:[#allocation7 + $0x60] sm:$0xff]
    %v1692 = vld [vmem:[#allocation7 + $0x68] sm:$0xff]
    %v1693 = vld [vmem:[#allocation7 + $0x70] sm:$0xff]
    %v1694 = vld [vmem:[#allocation7 + $0x78] sm:$0xff]
    %v1695 = vld [vmem:[#allocation7 + $0x80] sm:$0xff]
    %v1696 = vld [vmem:[#allocation7 + $0x88] sm:$0xff]
    %v1697 = vld [vmem:[#allocation7 + $0x90] sm:$0xff]
    %v1698 = vld [vmem:[#allocation7 + $0x98] sm:$0xff]
    %v1699 = vld [vmem:[#allocation7 + $0xa0] sm:$0xff]
    %v1700 = vld [vmem:[#allocation7 + $0xa8] sm:$0xff]
    %v1701 = vld [vmem:[#allocation7 + $0xb0] sm:$0xff]
    %v1702 = vld [vmem:[#allocation7 + $0xb8] sm:$0xff]
    %v1703 = vld [vmem:[#allocation7 + $0xc0] sm:$0xff]
    %v1704 = vld [vmem:[#allocation7 + $0xc8] sm:$0xff]
    %v1705 = vld [vmem:[#allocation7 + $0xd0] sm:$0xff]
    %v1706 = vld [vmem:[#allocation7 + $0xd8] sm:$0xff]
    %v1707 = vld [vmem:[#allocation7 + $0xe0] sm:$0xff]
    %v1708 = vld [vmem:[#allocation7 + $0xe8] sm:$0xff]
    %v1709 = vld [vmem:[#allocation7 + $0xf0] sm:$0xff]
    %v1710 = vld [vmem:[#allocation7 + $0xf8] sm:$0xff]
    %v1711 = vld [vmem:[#allocation7 + $0x100] sm:$0xff]
    %v1712 = vld [vmem:[#allocation7 + $0x108] sm:$0xff]
    %v1713 = vld [vmem:[#allocation7 + $0x110] sm:$0xff]
    %v1714 = vld [vmem:[#allocation7 + $0x118] sm:$0xff]
    %v1715 = vld [vmem:[#allocation7 + $0x120] sm:$0xff]
    %v1716 = vld [vmem:[#allocation7 + $0x128] sm:$0xff]
    %v1717 = vld [vmem:[#allocation7 + $0x130] sm:$0xff]
    %v1718 = vld [vmem:[#allocation7 + $0x138] sm:$0xff]
    %v1719 = vld [vmem:[#allocation7 + $0x140] sm:$0xff]
    %v1720 = vld [vmem:[#allocation7 + $0x148] sm:$0xff]
    %v1721 = vld [vmem:[#allocation7 + $0x150] sm:$0xff]
    %v1722 = vld [vmem:[#allocation7 + $0x158] sm:$0xff]
    %v1723 = vld [vmem:[#allocation7 + $0x160] sm:$0xff]
    %v1724 = vld [vmem:[#allocation7 + $0x168] sm:$0xff]
    %v1725 = vld [vmem:[#allocation7 + $0x170] sm:$0xff]
    %v1726 = vld [vmem:[#allocation7 + $0x178] sm:$0xff]
    %v1727 = vld [vmem:[#allocation7 + $0x180] sm:$0xff]
    %v1728 = vld [vmem:[#allocation7 + $0x188] sm:$0xff]
    %v1729 = vld [vmem:[#allocation7 + $0x190] sm:$0xff]
    %v1730 = vld [vmem:[#allocation7 + $0x198] sm:$0xff]
    %v1731 = vld [vmem:[#allocation7 + $0x1a0] sm:$0xff]
    %v1732 = vld [vmem:[#allocation7 + $0x1a8] sm:$0xff]
    %v1733 = vld [vmem:[#allocation7 + $0x1b0] sm:$0xff]
    %v1734 = vld [vmem:[#allocation7 + $0x1b8] sm:$0xff]
    %v1735 = vld [vmem:[#allocation7 + $0x1c0] sm:$0xff]
    %v1736 = vld [vmem:[#allocation7 + $0x1c8] sm:$0xff]
    %v1737 = vld [vmem:[#allocation7 + $0x1d0] sm:$0xff]
    %v1738 = vld [vmem:[#allocation7 + $0x1d8] sm:$0xff]
    %v1739 = vld [vmem:[#allocation7 + $0x1e0] sm:$0xff]
    %v1740 = vld [vmem:[#allocation7 + $0x1e8] sm:$0xff]
    %v1741 = vld [vmem:[#allocation7 + $0x1f0] sm:$0xff]
    %v1742 = vld [vmem:[#allocation7 + $0x1f8] sm:$0xff]
    %v1743 = vld [vmem:[%s4] sm:$0x3]
    %v1745 = vlaneseq
    %v1746 = vshrl.u32 %v1745, 7
    %v1747 = vsub.s32 0, %v1746
    %v1748 = vrot.slane %v1743, %v1747
    %v1749 = vlaneseq
    %v1750 = vshrl.u32 %v1749, 7
    %v1751 = vsub.s32 1, %v1750
    %v1752 = vrot.slane %v1743, %v1751
    %v1819 = vunpack.c.l.b16 %v1679
    %v1820 = vunpack.c.h.b16 %v1679
    %v1821 = vunpack.c.l.b16 %v1680
    %v1822 = vunpack.c.h.b16 %v1680
    %v1823 = vunpack.c.l.b16 %v1681
    %v1824 = vunpack.c.h.b16 %v1681
    %v1825 = vunpack.c.l.b16 %v1682
    %v1826 = vunpack.c.h.b16 %v1682
    %v1827 = vunpack.c.l.b16 %v1683
    %v1828 = vunpack.c.h.b16 %v1683
    %v1829 = vunpack.c.l.b16 %v1684
    %v1830 = vunpack.c.h.b16 %v1684
    %v1831 = vunpack.c.l.b16 %v1685
    %v1832 = vunpack.c.h.b16 %v1685
    %v1833 = vunpack.c.l.b16 %v1686
    %v1834 = vunpack.c.h.b16 %v1686
    %v1835 = vunpack.c.l.b16 %v1687
    %v1836 = vunpack.c.h.b16 %v1687
    %v1837 = vunpack.c.l.b16 %v1688
    %v1838 = vunpack.c.h.b16 %v1688
    %v1839 = vunpack.c.l.b16 %v1689
    %v1840 = vunpack.c.h.b16 %v1689
    %v1841 = vunpack.c.l.b16 %v1690
    %v1842 = vunpack.c.h.b16 %v1690
    %v1843 = vunpack.c.l.b16 %v1691
    %v1844 = vunpack.c.h.b16 %v1691
    %v1845 = vunpack.c.l.b16 %v1692
    %v1846 = vunpack.c.h.b16 %v1692
    %v1847 = vunpack.c.l.b16 %v1693
    %v1848 = vunpack.c.h.b16 %v1693
    %v1849 = vunpack.c.l.b16 %v1694
    %v1850 = vunpack.c.h.b16 %v1694
    %v1851 = vunpack.c.l.b16 %v1695
    %v1852 = vunpack.c.h.b16 %v1695
    %v1853 = vunpack.c.l.b16 %v1696
    %v1854 = vunpack.c.h.b16 %v1696
    %v1855 = vunpack.c.l.b16 %v1697
    %v1856 = vunpack.c.h.b16 %v1697
    %v1857 = vunpack.c.l.b16 %v1698
    %v1858 = vunpack.c.h.b16 %v1698
    %v1859 = vunpack.c.l.b16 %v1699
    %v1860 = vunpack.c.h.b16 %v1699
    %v1861 = vunpack.c.l.b16 %v1700
    %v1862 = vunpack.c.h.b16 %v1700
    %v1863 = vunpack.c.l.b16 %v1701
    %v1864 = vunpack.c.h.b16 %v1701
    %v1865 = vunpack.c.l.b16 %v1702
    %v1866 = vunpack.c.h.b16 %v1702
    %v1867 = vunpack.c.l.b16 %v1703
    %v1868 = vunpack.c.h.b16 %v1703
    %v1869 = vunpack.c.l.b16 %v1704
    %v1870 = vunpack.c.h.b16 %v1704
    %v1871 = vunpack.c.l.b16 %v1705
    %v1872 = vunpack.c.h.b16 %v1705
    %v1873 = vunpack.c.l.b16 %v1706
    %v1874 = vunpack.c.h.b16 %v1706
    %v1875 = vunpack.c.l.b16 %v1707
    %v1876 = vunpack.c.h.b16 %v1707
    %v1877 = vunpack.c.l.b16 %v1708
    %v1878 = vunpack.c.h.b16 %v1708
    %v1879 = vunpack.c.l.b16 %v1709
    %v1880 = vunpack.c.h.b16 %v1709
    %v1881 = vunpack.c.l.b16 %v1710
    %v1882 = vunpack.c.h.b16 %v1710
    %v1883 = vunpack.c.l.b16 %v1711
    %v1884 = vunpack.c.h.b16 %v1711
    %v1885 = vunpack.c.l.b16 %v1712
    %v1886 = vunpack.c.h.b16 %v1712
    %v1887 = vunpack.c.l.b16 %v1713
    %v1888 = vunpack.c.h.b16 %v1713
    %v1889 = vunpack.c.l.b16 %v1714
    %v1890 = vunpack.c.h.b16 %v1714
    %v1891 = vunpack.c.l.b16 %v1715
    %v1892 = vunpack.c.h.b16 %v1715
    %v1893 = vunpack.c.l.b16 %v1716
    %v1894 = vunpack.c.h.b16 %v1716
    %v1895 = vunpack.c.l.b16 %v1717
    %v1896 = vunpack.c.h.b16 %v1717
    %v1897 = vunpack.c.l.b16 %v1718
    %v1898 = vunpack.c.h.b16 %v1718
    %v1899 = vunpack.c.l.b16 %v1719
    %v1900 = vunpack.c.h.b16 %v1719
    %v1901 = vunpack.c.l.b16 %v1720
    %v1902 = vunpack.c.h.b16 %v1720
    %v1903 = vunpack.c.l.b16 %v1721
    %v1904 = vunpack.c.h.b16 %v1721
    %v1905 = vunpack.c.l.b16 %v1722
    %v1906 = vunpack.c.h.b16 %v1722
    %v1907 = vunpack.c.l.b16 %v1723
    %v1908 = vunpack.c.h.b16 %v1723
    %v1909 = vunpack.c.l.b16 %v1724
    %v1910 = vunpack.c.h.b16 %v1724
    %v1911 = vunpack.c.l.b16 %v1725
    %v1912 = vunpack.c.h.b16 %v1725
    %v1913 = vunpack.c.l.b16 %v1726
    %v1914 = vunpack.c.h.b16 %v1726
    %v1915 = vunpack.c.l.b16 %v1727
    %v1916 = vunpack.c.h.b16 %v1727
    %v1917 = vunpack.c.l.b16 %v1728
    %v1918 = vunpack.c.h.b16 %v1728
    %v1919 = vunpack.c.l.b16 %v1729
    %v1920 = vunpack.c.h.b16 %v1729
    %v1921 = vunpack.c.l.b16 %v1730
    %v1922 = vunpack.c.h.b16 %v1730
    %v1923 = vunpack.c.l.b16 %v1731
    %v1924 = vunpack.c.h.b16 %v1731
    %v1925 = vunpack.c.l.b16 %v1732
    %v1926 = vunpack.c.h.b16 %v1732
    %v1927 = vunpack.c.l.b16 %v1733
    %v1928 = vunpack.c.h.b16 %v1733
    %v1929 = vunpack.c.l.b16 %v1734
    %v1930 = vunpack.c.h.b16 %v1734
    %v1931 = vunpack.c.l.b16 %v1735
    %v1932 = vunpack.c.h.b16 %v1735
    %v1933 = vunpack.c.l.b16 %v1736
    %v1934 = vunpack.c.h.b16 %v1736
    %v1935 = vunpack.c.l.b16 %v1737
    %v1936 = vunpack.c.h.b16 %v1737
    %v1937 = vunpack.c.l.b16 %v1738
    %v1938 = vunpack.c.h.b16 %v1738
    %v1939 = vunpack.c.l.b16 %v1739
    %v1940 = vunpack.c.h.b16 %v1739
    %v1941 = vunpack.c.l.b16 %v1740
    %v1942 = vunpack.c.h.b16 %v1740
    %v1943 = vunpack.c.l.b16 %v1741
    %v1944 = vunpack.c.h.b16 %v1741
    %v1945 = vunpack.c.l.b16 %v1742
    %v1946 = vunpack.c.h.b16 %v1742
    %v1947 = vpack.c.b16 %v1821, %v1819
    %v1948 = vpack.c.b16 %v1822, %v1820
    %v1949 = vpack.c.b16 %v1825, %v1823
    %v1950 = vpack.c.b16 %v1826, %v1824
    %v1951 = vpack.c.b16 %v1829, %v1827
    %v1952 = vpack.c.b16 %v1830, %v1828
    %v1953 = vpack.c.b16 %v1833, %v1831
    %v1954 = vpack.c.b16 %v1834, %v1832
    %v1955 = vpack.c.b16 %v1837, %v1835
    %v1956 = vpack.c.b16 %v1838, %v1836
    %v1957 = vpack.c.b16 %v1841, %v1839
    %v1958 = vpack.c.b16 %v1842, %v1840
    %v1959 = vpack.c.b16 %v1845, %v1843
    %v1960 = vpack.c.b16 %v1846, %v1844
    %v1961 = vpack.c.b16 %v1849, %v1847
    %v1962 = vpack.c.b16 %v1850, %v1848
    %v1963 = vpack.c.b16 %v1853, %v1851
    %v1964 = vpack.c.b16 %v1854, %v1852
    %v1965 = vpack.c.b16 %v1857, %v1855
    %v1966 = vpack.c.b16 %v1858, %v1856
    %v1967 = vpack.c.b16 %v1861, %v1859
    %v1968 = vpack.c.b16 %v1862, %v1860
    %v1969 = vpack.c.b16 %v1865, %v1863
    %v1970 = vpack.c.b16 %v1866, %v1864
    %v1971 = vpack.c.b16 %v1869, %v1867
    %v1972 = vpack.c.b16 %v1870, %v1868
    %v1973 = vpack.c.b16 %v1873, %v1871
    %v1974 = vpack.c.b16 %v1874, %v1872
    %v1975 = vpack.c.b16 %v1877, %v1875
    %v1976 = vpack.c.b16 %v1878, %v1876
    %v1977 = vpack.c.b16 %v1881, %v1879
    %v1978 = vpack.c.b16 %v1882, %v1880
    %v1979 = vpack.c.b16 %v1885, %v1883
    %v1980 = vpack.c.b16 %v1886, %v1884
    %v1981 = vpack.c.b16 %v1889, %v1887
    %v1982 = vpack.c.b16 %v1890, %v1888
    %v1983 = vpack.c.b16 %v1893, %v1891
    %v1984 = vpack.c.b16 %v1894, %v1892
    %v1985 = vpack.c.b16 %v1897, %v1895
    %v1986 = vpack.c.b16 %v1898, %v1896
    %v1987 = vpack.c.b16 %v1901, %v1899
    %v1988 = vpack.c.b16 %v1902, %v1900
    %v1989 = vpack.c.b16 %v1905, %v1903
    %v1990 = vpack.c.b16 %v1906, %v1904
    %v1991 = vpack.c.b16 %v1909, %v1907
    %v1992 = vpack.c.b16 %v1910, %v1908
    %v1993 = vpack.c.b16 %v1913, %v1911
    %v1994 = vpack.c.b16 %v1914, %v1912
    %v1995 = vpack.c.b16 %v1917, %v1915
    %v1996 = vpack.c.b16 %v1918, %v1916
    %v1997 = vpack.c.b16 %v1921, %v1919
    %v1998 = vpack.c.b16 %v1922, %v1920
    %v1999 = vpack.c.b16 %v1925, %v1923
    %v2000 = vpack.c.b16 %v1926, %v1924
    %v2001 = vpack.c.b16 %v1929, %v1927
    %v2002 = vpack.c.b16 %v1930, %v1928
    %v2003 = vpack.c.b16 %v1933, %v1931
    %v2004 = vpack.c.b16 %v1934, %v1932
    %v2005 = vpack.c.b16 %v1937, %v1935
    %v2006 = vpack.c.b16 %v1938, %v1936
    %v2007 = vpack.c.b16 %v1941, %v1939
    %v2008 = vpack.c.b16 %v1942, %v1940
    %v2009 = vpack.c.b16 %v1945, %v1943
    %v2010 = vpack.c.b16 %v1946, %v1944
    %2075 = vmatprep.subr.bf16.mxu0 %v1962
    %2076 = vmatpush1.bf16.msra.mxu0 %v1961
    %2077 = vmatprep.subr.bf16.mxu0 %v1960
    %2078 = vmatpush1.bf16.msra.mxu0 %v1959
    %2079 = vmatprep.subr.bf16.mxu0 %v1958
    %2080 = vmatpush1.bf16.msra.mxu0 %v1957
    %2081 = vmatprep.subr.bf16.mxu0 %v1956
    %2082 = vmatpush1.bf16.msra.mxu0 %v1955
    %2083 = vmatprep.subr.bf16.mxu0 %v1954
    %2084 = vmatpush1.bf16.msra.mxu0 %v1953
    %2085 = vmatprep.subr.bf16.mxu0 %v1952
    %2086 = vmatpush1.bf16.msra.mxu0 %v1951
    %2087 = vmatprep.subr.bf16.mxu0 %v1950
    %2088 = vmatpush1.bf16.msra.mxu0 %v1949
    %2089 = vmatprep.subr.bf16.mxu0 %v1948
    %2090 = vmatpush1.bf16.msra.mxu0 %v1947
    %2091 = vmatprep.subr.bf16.mxu0 %v1978
    %2092 = vmatpush2.bf16.msra.mxu0 %v1977
    %2093 = vmatprep.subr.bf16.mxu0 %v1976
    %2094 = vmatpush2.bf16.msra.mxu0 %v1975
    %2095 = vmatprep.subr.bf16.mxu0 %v1974
    %2096 = vmatpush2.bf16.msra.mxu0 %v1973
    %2097 = vmatprep.subr.bf16.mxu0 %v1972
    %2098 = vmatpush2.bf16.msra.mxu0 %v1971
    %2099 = vmatprep.subr.bf16.mxu0 %v1970
    %2100 = vmatpush2.bf16.msra.mxu0 %v1969
    %2101 = vmatprep.subr.bf16.mxu0 %v1968
    %2102 = vmatpush2.bf16.msra.mxu0 %v1967
    %2103 = vmatprep.subr.bf16.mxu0 %v1966
    %2104 = vmatpush2.bf16.msra.mxu0 %v1965
    %2105 = vmatprep.subr.bf16.mxu0 %v1964
    %2106 = vmatpush2.bf16.msra.mxu0 %v1963
    %2107 = vmatprep.mubr.bf16.mxu0 %v1676
    %2108 = vmatmul.mubr.bf16.gmra.mxu0 %v1675
    %v2109 = vpop.f32.mrf.mxu0
    %v2110 = vadd.f32 %v1748, %v2109
    %v2111 = vpop.f32.mrf.mxu0
    %v2112 = vadd.f32 %v1752, %v2111
    %v2113 = vpop.f32.mrf.mxu0
    %v2114 = vadd.f32 %v1748, %v2113
    %v2115 = vpop.f32.mrf.mxu0
    %v2116 = vadd.f32 %v1752, %v2115
    %2117 = vdwg.mxu0
    %2118 = vmatprep.subr.bf16.mxu0 %v1994
    %2119 = vmatpush1.bf16.msra.mxu0 %v1993
    %2120 = vmatprep.subr.bf16.mxu0 %v1992
    %2121 = vmatpush1.bf16.msra.mxu0 %v1991
    %2122 = vmatprep.subr.bf16.mxu0 %v1990
    %2123 = vmatpush1.bf16.msra.mxu0 %v1989
    %2124 = vmatprep.subr.bf16.mxu0 %v1988
    %2125 = vmatpush1.bf16.msra.mxu0 %v1987
    %2126 = vmatprep.subr.bf16.mxu0 %v1986
    %2127 = vmatpush1.bf16.msra.mxu0 %v1985
    %2128 = vmatprep.subr.bf16.mxu0 %v1984
    %2129 = vmatpush1.bf16.msra.mxu0 %v1983
    %2130 = vmatprep.subr.bf16.mxu0 %v1982
    %2131 = vmatpush1.bf16.msra.mxu0 %v1981
    %2132 = vmatprep.subr.bf16.mxu0 %v1980
    %2133 = vmatpush1.bf16.msra.mxu0 %v1979
    %2134 = vmatprep.subr.bf16.mxu0 %v2010
    %2135 = vmatpush2.bf16.msra.mxu0 %v2009
    %2136 = vmatprep.subr.bf16.mxu0 %v2008
    %2137 = vmatpush2.bf16.msra.mxu0 %v2007
    %2138 = vmatprep.subr.bf16.mxu0 %v2006
    %2139 = vmatpush2.bf16.msra.mxu0 %v2005
    %2140 = vmatprep.subr.bf16.mxu0 %v2004
    %2141 = vmatpush2.bf16.msra.mxu0 %v2003
    %2142 = vmatprep.subr.bf16.mxu0 %v2002
    %2143 = vmatpush2.bf16.msra.mxu0 %v2001
    %2144 = vmatprep.subr.bf16.mxu0 %v2000
    %2145 = vmatpush2.bf16.msra.mxu0 %v1999
    %2146 = vmatprep.subr.bf16.mxu0 %v1998
    %2147 = vmatpush2.bf16.msra.mxu0 %v1997
    %2148 = vmatprep.subr.bf16.mxu0 %v1996
    %2149 = vmatpush2.bf16.msra.mxu0 %v1995
    %2150 = vmatprep.mubr.bf16.mxu0 %v1678
    %2151 = vmatmul.mubr.bf16.gmra.mxu0 %v1677
    %v2152 = vpop.f32.mrf.mxu0
    %v2153 = vadd.f32 %v2110, %v2152
    %v2154 = vpop.f32.mrf.mxu0
    %v2155 = vadd.f32 %v2112, %v2154
    %v2156 = vpop.f32.mrf.mxu0
    %v2157 = vadd.f32 %v2114, %v2156
    %v2158 = vpop.f32.mrf.mxu0
    %v2159 = vadd.f32 %v2116, %v2158
    %2160 = vdwg.mxu0
    %v2161 = vmul.f32 %v2153, 0.01
    %v2162 = vmul.f32 %v2155, 0.01
    %v2163 = vmul.f32 %v2157, 0.01
    %v2164 = vmul.f32 %v2159, 0.01
    %v2165 = vmax.f32 %v2153, %v2161
    %v2166 = vmax.f32 %v2155, %v2162
    %v2167 = vmax.f32 %v2157, %v2163
    %v2168 = vmax.f32 %v2159, %v2164
    %v2169 = vld [vmem:[%s5] sm:$0x3]
    %v2171 = vlaneseq
    %v2172 = vshrl.u32 %v2171, 7
    %v2173 = vsub.s32 0, %v2172
    %v2174 = vrot.slane %v2169, %v2173
    %v2175 = vlaneseq
    %v2176 = vshrl.u32 %v2175, 7
    %v2177 = vsub.s32 1, %v2176
    %v2178 = vrot.slane %v2169, %v2177
    %v2181 = vmul.f32 %v2165, %v2174
    %v2182 = vmul.f32 %v2166, %v2178
    %v2183 = vmul.f32 %v2167, %v2174
    %v2184 = vmul.f32 %v2168, %v2178
    %v2185 = vadd.f32 %v2181, %v2182
    %2186 = vadd.xlane.f32.xlu0 %v2185
    %v2187 = vpop.xlane.xlu0 %2186
    %v2188 = vadd.f32 %v2183, %v2184
    %2189 = vadd.xlane.f32.xlu0 %v2188
    %v2190 = vpop.xlane.xlu0 %2189
    %v2191 = vld [vmem:[#allocation2] sm:$0x1]
    %v2193 = vlaneseq
    %v2194 = vshrl.u32 %v2193, 7
    %v2195 = vsub.s32 0, %v2194
    %v2196 = vrot.slane %v2191, %v2195
    %v2198 = vadd.f32 %v2187, %v2196
    %v2199 = vadd.f32 %v2190, %v2196
    %v2200 = vxor.u32 %v2198, 2147483648
    %v2201 = vxor.u32 %v2199, 2147483648
    %v2202 = vmul.f32 %v2200, 1.442695
    %v2203 = vpow.pop %v2202
    %v2204 = vmul.f32 %v2201, 1.442695
    %v2205 = vpow.pop %v2204
    %v2206 = vadd.f32 %v2203, 1.0
    %v2207 = vadd.f32 %v2205, 1.0
    %v2208 = vrcp.pop %v2206
    %v2209 = vmul.f32 1.0, %v2208
    %v2210 = vrcp.pop %v2207
    %v2211 = vmul.f32 1.0, %v2210
    %vm2212 = vcmask 7168
    %2213 = vst.msk [vmem:[%s7] sm:$0xff] %vm2212, %v2209
    %2214 = vst.msk [vmem:[%s7 + $0x8] sm:$0xff] %vm2212, %v2211
    // Predicated region
    $region42: #{tpu_custom_call.1} parent=1 // pred_check
      _
    $region43: #{tpu_custom_call.1} parent=1 // pred_check_branch
      %2216 = sbr.rel (0) target = $region45
    $region44: #{tpu_custom_call.1} parent=1 // pred_region
      _
    $region45: #{tpu_custom_call.1} parent=1 // pred_fallthru
      _
    // Predicated region
    $region46: #{tpu_custom_call.1} parent=1 // pred_check
      _
    $region47: #{tpu_custom_call.1} parent=1 // pred_check_branch
      %2218 = sbr.rel (0) target = $region49
    $region48: #{tpu_custom_call.1} parent=1 // pred_region
      _
    $region49: #{tpu_custom_call.1} parent=1 // pred_fallthru
      _
    %2219 = vsyncpa [#allocation4], 1
    %2220 = vsyncpa [#allocation6], 1

</llo_original>
